<compile_context>
chip_gen: v7x
topology: tpu7x:2x2x1
jax: 0.10.0
libtpu: 0.0.40
codegen_flags: <defaults>
</compile_context>

<pallas_src>
import functools

import jax
import jax.numpy as jnp
from jax.experimental import pallas as pl
from jax.experimental.pallas import tpu as pltpu


# ----------------------------------------------------------------------------
# In-kernel building blocks (operate on f32 values resident in VMEM/vregs)
# ----------------------------------------------------------------------------

def _conv1d(x, w_flat, b, K, *, relu):
    """nn.Conv1d(stride=1, padding=K//2) on a (C_in, L) tile as ONE matmul.

    w_flat: (C_out, K*C_in), flattened k-major (row index = k*C_in + ci).
    b:      (C_out, 1).
    """
    C_in, L = x.shape
    pad = K // 2
    L_out = L + 2 * pad - K + 1
    if pad:
        z = jnp.zeros((C_in, pad), x.dtype)
        xp = jnp.concatenate([z, x, z], axis=-1)        # zero pad, stays in VMEM
    else:
        xp = x
    if K > 1:                                           # im2col: (K*C_in, L_out)
        cols = jnp.concatenate([xp[:, k:k + L_out] for k in range(K)], axis=0)
    else:
        cols = xp[:, :L_out]
    y = jnp.dot(w_flat, cols, preferred_element_type=jnp.float32) + b
    if relu:
        y = jnp.maximum(y, 0.0)
    return y


def _maxpool2(y, pad):
    """F.pad(y, (0, pad), value=-1e10) + MaxPool1d(2) on a (C, L) tile.

    Uses 0/1 selection matmuls so L stays lane-dense (no (..., 2) reshape and no
    strided lane access).
    """
    C, L = y.shape
    L_half = (L + pad) // 2
    r = jax.lax.broadcasted_iota(jnp.int32, (L, L_half), 0)
    c = jax.lax.broadcasted_iota(jnp.int32, (L, L_half), 1)
    s_even = (r == 2 * c).astype(y.dtype)
    s_odd = (r == 2 * c + 1).astype(y.dtype)
    even = jnp.dot(y, s_even, preferred_element_type=jnp.float32)  # y[:, 2j]
    odd = jnp.dot(y, s_odd, preferred_element_type=jnp.float32)    # y[:, 2j+1]
    col = jax.lax.broadcasted_iota(jnp.int32, (1, L_half), 1)
    odd = jnp.where(2 * col + 1 < L, odd, -1e10)        # the -1e10 pad column
    return jnp.maximum(even, odd)


# ----------------------------------------------------------------------------
# Fused kernel: entire CNN_Block forward for one batch element per grid step
# ----------------------------------------------------------------------------

def _cnn_block_kernel(*refs, conv_ks, paddings, res_ks):
    it = iter(refs)
    x = next(it)[0].astype(jnp.float32)                 # (C_in, L)

    # Stem: conv -> relu -> (-1e10 pad) -> maxpool2 per layer.
    for K, pad in zip(conv_ks, paddings):
        w, b = next(it), next(it)
        y = _conv1d(x, w[...], b[...], K, relu=True)
        x = _maxpool2(y, pad)

    # Residual blocks; dropout is identity at inference.
    # TODO(synk): ResCNNBlock source was not provided; this implements the
    # standard EQTransformer-style pre-activation (BN -> ReLU -> Conv) x2 + skip.
    for K in res_ks:
        s1, t1, w1, b1, s2, t2, w2, b2 = [next(it) for _ in range(8)]
        h = jnp.maximum(x * s1[...] + t1[...], 0.0)     # BN affine + ReLU, fused
        h = _conv1d(h, w1[...], b1[...], K, relu=False)
        h = jnp.maximum(h * s2[...] + t2[...], 0.0)
        h = _conv1d(h, w2[...], b2[...], K, relu=False)
        x = x + h

    o_ref = next(it)
    o_ref[0] = x.astype(o_ref.dtype)


# ----------------------------------------------------------------------------
# Wrapper: one pallas_call for the whole block
# ----------------------------------------------------------------------------

def cnn_block_forward(x, params):
    B, C_in, L = x.shape
    conv_ks = tuple(params["conv_ks"])
    paddings = tuple(params["paddings"])
    res_ks = tuple(params["res_ks"])

    inputs = [x]
    in_specs = [pl.BlockSpec((1, C_in, L), lambda bi: (bi, 0, 0))]

    def add_param(a):                                   # full-block, grid-invariant
        inputs.append(a)
        in_specs.append(pl.BlockSpec(a.shape, lambda bi, n=a.ndim: (0,) * n))

    for w_flat, b in params["convs"]:
        add_param(w_flat)
        add_param(b)
    for p in params["res"]:
        for name in ("bn1_scale", "bn1_shift", "w1", "b1",
                     "bn2_scale", "bn2_shift", "w2", "b2"):
            add_param(p[name])

    # Static output-shape bookkeeping (mirrors the kernel exactly).
    C, Lc = C_in, L
    for (w_flat, _), K, pad in zip(params["convs"], conv_ks, paddings):
        C = w_flat.shape[0]
        Lc = Lc + 2 * (K // 2) - K + 1                  # conv output length
        Lc = (Lc + pad) // 2                            # pad + MaxPool1d(2)

    kern = functools.partial(_cnn_block_kernel, conv_ks=conv_ks,
                             paddings=paddings, res_ks=res_ks)
    return pl.pallas_call(
        kern,
        out_shape=jax.ShapeDtypeStruct((B, C, Lc), x.dtype),
        grid=(B,),
        in_specs=in_specs,
        out_specs=pl.BlockSpec((1, C, Lc), lambda bi: (bi, 0, 0)),
        compiler_params=pltpu.CompilerParams(
            dimension_semantics=("parallel",)),         # batch grid -> both TCs on v7x
    )(*inputs)


# ----------------------------------------------------------------------------
# Parameter init (PyTorch-default-style); weights stored in kernel layout
# ----------------------------------------------------------------------------

def init_conv(key, c_in, c_out, k):
    kw, kb = jax.random.split(key)
    bound = 1.0 / jnp.sqrt(float(c_in * k))
    w = jax.random.uniform(kw, (c_out, c_in, k), jnp.float32, -bound, bound)
    b = jax.random.uniform(kb, (c_out,), jnp.float32, -bound, bound)
    # Hoisted to kernel layout at init time: (C_out, K*C_in) k-major; bias (C_out, 1).
    w_flat = jnp.transpose(w, (0, 2, 1)).reshape(c_out, k * c_in)
    return w_flat, b.reshape(c_out, 1)


def init_cnn_block(key, input_channels, filters, kernel_sizes, in_samples,
                   res_kernel_sizes, drop_rate):
    del drop_rate                                       # dropout = identity at eval
    params = {"convs": [], "paddings": [], "conv_ks": list(kernel_sizes),
              "res": [], "res_ks": list(res_kernel_sizes)}
    for c_in, c_out, k in zip([input_channels] + filters[:-1], filters, kernel_sizes):
        key, sub = jax.random.split(key)
        params["convs"].append(init_conv(sub, c_in, c_out, k))
        padding = in_samples % 2
        params["paddings"].append(padding)
        in_samples = (in_samples + padding) // 2
    C = filters[-1]
    eps = 1e-5
    # Eval-mode BatchNorm1d with default stats (gamma=1, beta=0, mean=0, var=1)
    # folded to a per-channel affine.
    bn_scale = jnp.full((C, 1), 1.0 / jnp.sqrt(1.0 + eps), jnp.float32)
    bn_shift = jnp.zeros((C, 1), jnp.float32)
    for k in res_kernel_sizes:
        key, s1, s2 = jax.random.split(key, 3)
        w1, b1 = init_conv(s1, C, C, k)
        w2, b2 = init_conv(s2, C, C, k)
        params["res"].append(dict(w1=w1, b1=b1, w2=w2, b2=b2,
                                  bn1_scale=bn_scale, bn1_shift=bn_shift,
                                  bn2_scale=bn_scale, bn2_shift=bn_shift))
    return params


# ----------------------------------------------------------------------------
# Pure-JAX reference (same math, via XLA) for correctness checking
# ----------------------------------------------------------------------------

def _reference_forward(x, params):
    def conv_ref(y, w_flat, b, K):
        C_out = w_flat.shape[0]
        C_in = y.shape[1]
        w = w_flat.reshape(C_out, K, C_in).transpose(0, 2, 1)   # (C_out, C_in, K)
        out = jax.lax.conv_general_dilated(
            y, w, window_strides=(1,), padding=[(K // 2, K // 2)],
            dimension_numbers=("NCH", "OIH", "NCH"),
            precision=jax.lax.Precision.HIGHEST)
        return out + b[None, :, :]

    y = x
    for (w_flat, b), K, pad in zip(params["convs"], params["conv_ks"],
                                   params["paddings"]):
        y = jax.nn.relu(conv_ref(y, w_flat, b, K))
        if pad:
            y = jnp.pad(y, ((0, 0), (0, 0), (0, pad)),
                        constant_values=-10000000000.0)
        B, C, L = y.shape
        y = jnp.max(y[:, :, :(L // 2) * 2].reshape(B, C, L // 2, 2), axis=-1)
    for p, K in zip(params["res"], params["res_ks"]):
        h = jax.nn.relu(y * p["bn1_scale"][None] + p["bn1_shift"][None])
        h = conv_ref(h, p["w1"], p["b1"], K)
        h = jax.nn.relu(h * p["bn2_scale"][None] + p["bn2_shift"][None])
        h = conv_ref(h, p["w2"], p["b2"], K)
        y = y + h
    return y


# ----------------------------------------------------------------------------

if __name__ == "__main__":
    key = jax.random.PRNGKey(0)
    k_params, k_x = jax.random.split(key)

    input_channels = 3
    filters = [8, 16]
    kernel_sizes = [3, 3]
    in_samples = 15          # odd -> exercises the -1e10 pad-before-pool branch
    res_kernel_sizes = [3, 3]
    drop_rate = 0.1

    params = init_cnn_block(k_params, input_channels, filters, kernel_sizes,
                            in_samples, res_kernel_sizes, drop_rate)
    x = jax.random.normal(k_x, (2, input_channels, in_samples), jnp.float32)

    out = cnn_block_forward(x, params)          # expected shape: (2, 16, 4)
    jax.block_until_ready(out)
    assert out.shape == (2, filters[-1], 4), out.shape

    ref = _reference_forward(x, params)
    assert jnp.allclose(out, ref, rtol=2e-2, atol=2e-2), \
        float(jnp.max(jnp.abs(out - ref)))

    print("KERNEL_OK")
</pallas_src>

<mosaic_0001>
module attributes {stable_mosaic.version = 11 : i64} {
  func.func @_cnn_block_kernel(%arg0: i32, %arg1: memref<1x3x15xf32, #tpu.memory_space<vmem>>, %arg2: memref<8x9xf32, #tpu.memory_space<vmem>>, %arg3: memref<8x1xf32, #tpu.memory_space<vmem>>, %arg4: memref<16x24xf32, #tpu.memory_space<vmem>>, %arg5: memref<16x1xf32, #tpu.memory_space<vmem>>, %arg6: memref<16x1xf32, #tpu.memory_space<vmem>>, %arg7: memref<16x1xf32, #tpu.memory_space<vmem>>, %arg8: memref<16x48xf32, #tpu.memory_space<vmem>>, %arg9: memref<16x1xf32, #tpu.memory_space<vmem>>, %arg10: memref<16x1xf32, #tpu.memory_space<vmem>>, %arg11: memref<16x1xf32, #tpu.memory_space<vmem>>, %arg12: memref<16x48xf32, #tpu.memory_space<vmem>>, %arg13: memref<16x1xf32, #tpu.memory_space<vmem>>, %arg14: memref<16x1xf32, #tpu.memory_space<vmem>>, %arg15: memref<16x1xf32, #tpu.memory_space<vmem>>, %arg16: memref<16x48xf32, #tpu.memory_space<vmem>>, %arg17: memref<16x1xf32, #tpu.memory_space<vmem>>, %arg18: memref<16x1xf32, #tpu.memory_space<vmem>>, %arg19: memref<16x1xf32, #tpu.memory_space<vmem>>, %arg20: memref<16x48xf32, #tpu.memory_space<vmem>>, %arg21: memref<16x1xf32, #tpu.memory_space<vmem>>, %arg22: memref<1x16x4xf32, #tpu.memory_space<vmem>>) attributes {dimension_semantics = [#tpu.dimension_semantics<parallel>], iteration_bounds = array<i64: 2>, scalar_prefetch = 0 : i64, scratch_operands = 0 : i64, tpu.core_type = #tpu.core_type<tc>, window_params = [{transform_indices = @transform_0, window_bounds = array<i64: 1, 3, 15>}, {pipeline_mode = #tpu.pipeline_mode<synchronous>, transform_indices = @transform_1, window_bounds = array<i64: 8, 9>}, {pipeline_mode = #tpu.pipeline_mode<synchronous>, transform_indices = @transform_2, window_bounds = array<i64: 8, 1>}, {pipeline_mode = #tpu.pipeline_mode<synchronous>, transform_indices = @transform_3, window_bounds = array<i64: 16, 24>}, {pipeline_mode = #tpu.pipeline_mode<synchronous>, transform_indices = @transform_4, window_bounds = array<i64: 16, 1>}, {pipeline_mode = #tpu.pipeline_mode<synchronous>, transform_indices = @transform_5, window_bounds = array<i64: 16, 1>}, {pipeline_mode = #tpu.pipeline_mode<synchronous>, transform_indices = @transform_6, window_bounds = array<i64: 16, 1>}, {pipeline_mode = #tpu.pipeline_mode<synchronous>, transform_indices = @transform_7, window_bounds = array<i64: 16, 48>}, {pipeline_mode = #tpu.pipeline_mode<synchronous>, transform_indices = @transform_8, window_bounds = array<i64: 16, 1>}, {pipeline_mode = #tpu.pipeline_mode<synchronous>, transform_indices = @transform_9, window_bounds = array<i64: 16, 1>}, {pipeline_mode = #tpu.pipeline_mode<synchronous>, transform_indices = @transform_10, window_bounds = array<i64: 16, 1>}, {pipeline_mode = #tpu.pipeline_mode<synchronous>, transform_indices = @transform_11, window_bounds = array<i64: 16, 48>}, {pipeline_mode = #tpu.pipeline_mode<synchronous>, transform_indices = @transform_12, window_bounds = array<i64: 16, 1>}, {pipeline_mode = #tpu.pipeline_mode<synchronous>, transform_indices = @transform_13, window_bounds = array<i64: 16, 1>}, {pipeline_mode = #tpu.pipeline_mode<synchronous>, transform_indices = @transform_14, window_bounds = array<i64: 16, 1>}, {pipeline_mode = #tpu.pipeline_mode<synchronous>, transform_indices = @transform_15, window_bounds = array<i64: 16, 48>}, {pipeline_mode = #tpu.pipeline_mode<synchronous>, transform_indices = @transform_16, window_bounds = array<i64: 16, 1>}, {pipeline_mode = #tpu.pipeline_mode<synchronous>, transform_indices = @transform_17, window_bounds = array<i64: 16, 1>}, {pipeline_mode = #tpu.pipeline_mode<synchronous>, transform_indices = @transform_18, window_bounds = array<i64: 16, 1>}, {pipeline_mode = #tpu.pipeline_mode<synchronous>, transform_indices = @transform_19, window_bounds = array<i64: 16, 48>}, {pipeline_mode = #tpu.pipeline_mode<synchronous>, transform_indices = @transform_20, window_bounds = array<i64: 16, 1>}, {transform_indices = @transform_21, window_bounds = array<i64: 1, 16, 4>}]} {
    %c0 = arith.constant 0 : index
    %c0_0 = arith.constant 0 : index
    %c0_1 = arith.constant 0 : index
    %0 = vector.load %arg1[%c0, %c0_0, %c0_1] : memref<1x3x15xf32, #tpu.memory_space<vmem>>, vector<1x3x15xf32>
    %1 = vector.shape_cast %0 : vector<1x3x15xf32> to vector<3x15xf32>
    %c0_2 = arith.constant 0 : index
    %c0_3 = arith.constant 0 : index
    %2 = vector.load %arg2[%c0_2, %c0_3] : memref<8x9xf32, #tpu.memory_space<vmem>>, vector<8x9xf32>
    %c0_4 = arith.constant 0 : index
    %c0_5 = arith.constant 0 : index
    %3 = vector.load %arg3[%c0_4, %c0_5] : memref<8x1xf32, #tpu.memory_space<vmem>>, vector<8x1xf32>
    %cst = arith.constant 0.000000e+00 : f32
    %4 = vector.broadcast %cst : f32 to vector<3x1xf32>
    %5 = tpu.concatenate %4, %1, %4 in 1 : vector<3x1xf32>, vector<3x15xf32>, vector<3x1xf32> -> vector<3x17xf32>
    %6 = vector.extract_strided_slice %5 {offsets = [0, 0], sizes = [3, 15], strides = [1, 1]} : vector<3x17xf32> to vector<3x15xf32>
    %7 = vector.extract_strided_slice %5 {offsets = [0, 1], sizes = [3, 15], strides = [1, 1]} : vector<3x17xf32> to vector<3x15xf32>
    %8 = vector.extract_strided_slice %5 {offsets = [0, 2], sizes = [3, 15], strides = [1, 1]} : vector<3x17xf32> to vector<3x15xf32>
    %9 = tpu.concatenate %6, %7, %8 in 0 : vector<3x15xf32>, vector<3x15xf32>, vector<3x15xf32> -> vector<9x15xf32>
    %cst_6 = arith.constant dense<0.000000e+00> : vector<8x15xf32>
    %10 = tpu.matmul %2, %9, %cst_6 {dimension_numbers = #tpu.dot_dimension_numbers<[1], [0], [0], [1], [0, 0, 1, 1], [], []>} : vector<8x9xf32>, vector<9x15xf32>, vector<8x15xf32> -> vector<8x15xf32>
    %11 = vector.broadcast %3 : vector<8x1xf32> to vector<8x15xf32>
    %12 = arith.addf %10, %11 : vector<8x15xf32>
    %cst_7 = arith.constant 0.000000e+00 : f32
    %13 = vector.broadcast %cst_7 : f32 to vector<8x15xf32>
    %14 = arith.maximumf %12, %13 : vector<8x15xf32>
    %15 = tpu.iota {dimensions = array<i32: 0>} : vector<15x8xi32>
    %16 = tpu.iota {dimensions = array<i32: 1>} : vector<15x8xi32>
    %c2_i32 = arith.constant 2 : i32
    %17 = vector.broadcast %c2_i32 : i32 to vector<15x8xi32>
    %18 = arith.muli %17, %16 : vector<15x8xi32>
    %19 = arith.cmpi eq, %15, %18 : vector<15x8xi32>
    %20 = arith.extui %19 : vector<15x8xi1> to vector<15x8xi32>
    %21 = arith.sitofp %20 : vector<15x8xi32> to vector<15x8xf32>
    %c2_i32_8 = arith.constant 2 : i32
    %22 = vector.broadcast %c2_i32_8 : i32 to vector<15x8xi32>
    %23 = arith.muli %22, %16 : vector<15x8xi32>
    %c1_i32 = arith.constant 1 : i32
    %24 = vector.broadcast %c1_i32 : i32 to vector<15x8xi32>
    %25 = arith.addi %23, %24 : vector<15x8xi32>
    %26 = arith.cmpi eq, %15, %25 : vector<15x8xi32>
    %27 = arith.extui %26 : vector<15x8xi1> to vector<15x8xi32>
    %28 = arith.sitofp %27 : vector<15x8xi32> to vector<15x8xf32>
    %cst_9 = arith.constant dense<0.000000e+00> : vector<8x8xf32>
    %29 = tpu.matmul %14, %21, %cst_9 {dimension_numbers = #tpu.dot_dimension_numbers<[1], [0], [0], [1], [0, 0, 1, 1], [], []>} : vector<8x15xf32>, vector<15x8xf32>, vector<8x8xf32> -> vector<8x8xf32>
    %cst_10 = arith.constant dense<0.000000e+00> : vector<8x8xf32>
    %30 = tpu.matmul %14, %28, %cst_10 {dimension_numbers = #tpu.dot_dimension_numbers<[1], [0], [0], [1], [0, 0, 1, 1], [], []>} : vector<8x15xf32>, vector<15x8xf32>, vector<8x8xf32> -> vector<8x8xf32>
    %31 = tpu.iota {dimensions = array<i32: 1>} : vector<1x8xi32>
    %c2_i32_11 = arith.constant 2 : i32
    %32 = vector.broadcast %c2_i32_11 : i32 to vector<1x8xi32>
    %33 = arith.muli %32, %31 : vector<1x8xi32>
    %c1_i32_12 = arith.constant 1 : i32
    %34 = vector.broadcast %c1_i32_12 : i32 to vector<1x8xi32>
    %35 = arith.addi %33, %34 : vector<1x8xi32>
    %c15_i32 = arith.constant 15 : i32
    %36 = vector.broadcast %c15_i32 : i32 to vector<1x8xi32>
    %37 = arith.cmpi slt, %35, %36 : vector<1x8xi32>
    %cst_13 = arith.constant -1.000000e+10 : f32
    %38 = vector.shape_cast %37 : vector<1x8xi1> to vector<1x8xi1>
    %39 = vector.broadcast %38 : vector<1x8xi1> to vector<8x8xi1>
    %40 = vector.broadcast %cst_13 : f32 to vector<8x8xf32>
    %41 = arith.select %39, %30, %40 : vector<8x8xi1>, vector<8x8xf32>
    %42 = arith.maximumf %29, %41 : vector<8x8xf32>
    %c0_14 = arith.constant 0 : index
    %c0_15 = arith.constant 0 : index
    %43 = vector.load %arg4[%c0_14, %c0_15] : memref<16x24xf32, #tpu.memory_space<vmem>>, vector<16x24xf32>
    %c0_16 = arith.constant 0 : index
    %c0_17 = arith.constant 0 : index
    %44 = vector.load %arg5[%c0_16, %c0_17] : memref<16x1xf32, #tpu.memory_space<vmem>>, vector<16x1xf32>
    %cst_18 = arith.constant 0.000000e+00 : f32
    %45 = vector.broadcast %cst_18 : f32 to vector<8x1xf32>
    %46 = tpu.concatenate %45, %42, %45 in 1 : vector<8x1xf32>, vector<8x8xf32>, vector<8x1xf32> -> vector<8x10xf32>
    %47 = vector.extract_strided_slice %46 {offsets = [0, 0], sizes = [8, 8], strides = [1, 1]} : vector<8x10xf32> to vector<8x8xf32>
    %48 = vector.extract_strided_slice %46 {offsets = [0, 1], sizes = [8, 8], strides = [1, 1]} : vector<8x10xf32> to vector<8x8xf32>
    %49 = vector.extract_strided_slice %46 {offsets = [0, 2], sizes = [8, 8], strides = [1, 1]} : vector<8x10xf32> to vector<8x8xf32>
    %50 = tpu.concatenate %47, %48, %49 in 0 : vector<8x8xf32>, vector<8x8xf32>, vector<8x8xf32> -> vector<24x8xf32>
    %cst_19 = arith.constant dense<0.000000e+00> : vector<16x8xf32>
    %51 = tpu.matmul %43, %50, %cst_19 {dimension_numbers = #tpu.dot_dimension_numbers<[1], [0], [0], [1], [0, 0, 1, 1], [], []>} : vector<16x24xf32>, vector<24x8xf32>, vector<16x8xf32> -> vector<16x8xf32>
    %52 = vector.broadcast %44 : vector<16x1xf32> to vector<16x8xf32>
    %53 = arith.addf %51, %52 : vector<16x8xf32>
    %cst_20 = arith.constant 0.000000e+00 : f32
    %54 = vector.broadcast %cst_20 : f32 to vector<16x8xf32>
    %55 = arith.maximumf %53, %54 : vector<16x8xf32>
    %56 = tpu.iota {dimensions = array<i32: 0>} : vector<8x4xi32>
    %57 = tpu.iota {dimensions = array<i32: 1>} : vector<8x4xi32>
    %c2_i32_21 = arith.constant 2 : i32
    %58 = vector.broadcast %c2_i32_21 : i32 to vector<8x4xi32>
    %59 = arith.muli %58, %57 : vector<8x4xi32>
    %60 = arith.cmpi eq, %56, %59 : vector<8x4xi32>
    %61 = arith.extui %60 : vector<8x4xi1> to vector<8x4xi32>
    %62 = arith.sitofp %61 : vector<8x4xi32> to vector<8x4xf32>
    %c2_i32_22 = arith.constant 2 : i32
    %63 = vector.broadcast %c2_i32_22 : i32 to vector<8x4xi32>
    %64 = arith.muli %63, %57 : vector<8x4xi32>
    %c1_i32_23 = arith.constant 1 : i32
    %65 = vector.broadcast %c1_i32_23 : i32 to vector<8x4xi32>
    %66 = arith.addi %64, %65 : vector<8x4xi32>
    %67 = arith.cmpi eq, %56, %66 : vector<8x4xi32>
    %68 = arith.extui %67 : vector<8x4xi1> to vector<8x4xi32>
    %69 = arith.sitofp %68 : vector<8x4xi32> to vector<8x4xf32>
    %cst_24 = arith.constant dense<0.000000e+00> : vector<16x4xf32>
    %70 = tpu.matmul %55, %62, %cst_24 {dimension_numbers = #tpu.dot_dimension_numbers<[1], [0], [0], [1], [0, 0, 1, 1], [], []>} : vector<16x8xf32>, vector<8x4xf32>, vector<16x4xf32> -> vector<16x4xf32>
    %cst_25 = arith.constant dense<0.000000e+00> : vector<16x4xf32>
    %71 = tpu.matmul %55, %69, %cst_25 {dimension_numbers = #tpu.dot_dimension_numbers<[1], [0], [0], [1], [0, 0, 1, 1], [], []>} : vector<16x8xf32>, vector<8x4xf32>, vector<16x4xf32> -> vector<16x4xf32>
    %72 = tpu.iota {dimensions = array<i32: 1>} : vector<1x4xi32>
    %c2_i32_26 = arith.constant 2 : i32
    %73 = vector.broadcast %c2_i32_26 : i32 to vector<1x4xi32>
    %74 = arith.muli %73, %72 : vector<1x4xi32>
    %c1_i32_27 = arith.constant 1 : i32
    %75 = vector.broadcast %c1_i32_27 : i32 to vector<1x4xi32>
    %76 = arith.addi %74, %75 : vector<1x4xi32>
    %c8_i32 = arith.constant 8 : i32
    %77 = vector.broadcast %c8_i32 : i32 to vector<1x4xi32>
    %78 = arith.cmpi slt, %76, %77 : vector<1x4xi32>
    %cst_28 = arith.constant -1.000000e+10 : f32
    %79 = vector.shape_cast %78 : vector<1x4xi1> to vector<1x4xi1>
    %80 = vector.broadcast %79 : vector<1x4xi1> to vector<16x4xi1>
    %81 = vector.broadcast %cst_28 : f32 to vector<16x4xf32>
    %82 = arith.select %80, %71, %81 : vector<16x4xi1>, vector<16x4xf32>
    %83 = arith.maximumf %70, %82 : vector<16x4xf32>
    %c0_29 = arith.constant 0 : index
    %c0_30 = arith.constant 0 : index
    %84 = vector.load %arg6[%c0_29, %c0_30] : memref<16x1xf32, #tpu.memory_space<vmem>>, vector<16x1xf32>
    %85 = vector.broadcast %84 : vector<16x1xf32> to vector<16x4xf32>
    %86 = arith.mulf %83, %85 : vector<16x4xf32>
    %c0_31 = arith.constant 0 : index
    %c0_32 = arith.constant 0 : index
    %87 = vector.load %arg7[%c0_31, %c0_32] : memref<16x1xf32, #tpu.memory_space<vmem>>, vector<16x1xf32>
    %88 = vector.broadcast %87 : vector<16x1xf32> to vector<16x4xf32>
    %89 = arith.addf %86, %88 : vector<16x4xf32>
    %cst_33 = arith.constant 0.000000e+00 : f32
    %90 = vector.broadcast %cst_33 : f32 to vector<16x4xf32>
    %91 = arith.maximumf %89, %90 : vector<16x4xf32>
    %c0_34 = arith.constant 0 : index
    %c0_35 = arith.constant 0 : index
    %92 = vector.load %arg8[%c0_34, %c0_35] : memref<16x48xf32, #tpu.memory_space<vmem>>, vector<16x48xf32>
    %c0_36 = arith.constant 0 : index
    %c0_37 = arith.constant 0 : index
    %93 = vector.load %arg9[%c0_36, %c0_37] : memref<16x1xf32, #tpu.memory_space<vmem>>, vector<16x1xf32>
    %cst_38 = arith.constant 0.000000e+00 : f32
    %94 = vector.broadcast %cst_38 : f32 to vector<16x1xf32>
    %95 = tpu.concatenate %94, %91, %94 in 1 : vector<16x1xf32>, vector<16x4xf32>, vector<16x1xf32> -> vector<16x6xf32>
    %96 = vector.extract_strided_slice %95 {offsets = [0, 0], sizes = [16, 4], strides = [1, 1]} : vector<16x6xf32> to vector<16x4xf32>
    %97 = vector.extract_strided_slice %95 {offsets = [0, 1], sizes = [16, 4], strides = [1, 1]} : vector<16x6xf32> to vector<16x4xf32>
    %98 = vector.extract_strided_slice %95 {offsets = [0, 2], sizes = [16, 4], strides = [1, 1]} : vector<16x6xf32> to vector<16x4xf32>
    %99 = tpu.concatenate %96, %97, %98 in 0 : vector<16x4xf32>, vector<16x4xf32>, vector<16x4xf32> -> vector<48x4xf32>
    %cst_39 = arith.constant dense<0.000000e+00> : vector<16x4xf32>
    %100 = tpu.matmul %92, %99, %cst_39 {dimension_numbers = #tpu.dot_dimension_numbers<[1], [0], [0], [1], [0, 0, 1, 1], [], []>} : vector<16x48xf32>, vector<48x4xf32>, vector<16x4xf32> -> vector<16x4xf32>
    %101 = vector.broadcast %93 : vector<16x1xf32> to vector<16x4xf32>
    %102 = arith.addf %100, %101 : vector<16x4xf32>
    %c0_40 = arith.constant 0 : index
    %c0_41 = arith.constant 0 : index
    %103 = vector.load %arg10[%c0_40, %c0_41] : memref<16x1xf32, #tpu.memory_space<vmem>>, vector<16x1xf32>
    %104 = vector.broadcast %103 : vector<16x1xf32> to vector<16x4xf32>
    %105 = arith.mulf %102, %104 : vector<16x4xf32>
    %c0_42 = arith.constant 0 : index
    %c0_43 = arith.constant 0 : index
    %106 = vector.load %arg11[%c0_42, %c0_43] : memref<16x1xf32, #tpu.memory_space<vmem>>, vector<16x1xf32>
    %107 = vector.broadcast %106 : vector<16x1xf32> to vector<16x4xf32>
    %108 = arith.addf %105, %107 : vector<16x4xf32>
    %cst_44 = arith.constant 0.000000e+00 : f32
    %109 = vector.broadcast %cst_44 : f32 to vector<16x4xf32>
    %110 = arith.maximumf %108, %109 : vector<16x4xf32>
    %c0_45 = arith.constant 0 : index
    %c0_46 = arith.constant 0 : index
    %111 = vector.load %arg12[%c0_45, %c0_46] : memref<16x48xf32, #tpu.memory_space<vmem>>, vector<16x48xf32>
    %c0_47 = arith.constant 0 : index
    %c0_48 = arith.constant 0 : index
    %112 = vector.load %arg13[%c0_47, %c0_48] : memref<16x1xf32, #tpu.memory_space<vmem>>, vector<16x1xf32>
    %cst_49 = arith.constant 0.000000e+00 : f32
    %113 = vector.broadcast %cst_49 : f32 to vector<16x1xf32>
    %114 = tpu.concatenate %113, %110, %113 in 1 : vector<16x1xf32>, vector<16x4xf32>, vector<16x1xf32> -> vector<16x6xf32>
    %115 = vector.extract_strided_slice %114 {offsets = [0, 0], sizes = [16, 4], strides = [1, 1]} : vector<16x6xf32> to vector<16x4xf32>
    %116 = vector.extract_strided_slice %114 {offsets = [0, 1], sizes = [16, 4], strides = [1, 1]} : vector<16x6xf32> to vector<16x4xf32>
    %117 = vector.extract_strided_slice %114 {offsets = [0, 2], sizes = [16, 4], strides = [1, 1]} : vector<16x6xf32> to vector<16x4xf32>
    %118 = tpu.concatenate %115, %116, %117 in 0 : vector<16x4xf32>, vector<16x4xf32>, vector<16x4xf32> -> vector<48x4xf32>
    %cst_50 = arith.constant dense<0.000000e+00> : vector<16x4xf32>
    %119 = tpu.matmul %111, %118, %cst_50 {dimension_numbers = #tpu.dot_dimension_numbers<[1], [0], [0], [1], [0, 0, 1, 1], [], []>} : vector<16x48xf32>, vector<48x4xf32>, vector<16x4xf32> -> vector<16x4xf32>
    %120 = vector.broadcast %112 : vector<16x1xf32> to vector<16x4xf32>
    %121 = arith.addf %119, %120 : vector<16x4xf32>
    %122 = arith.addf %83, %121 : vector<16x4xf32>
    %c0_51 = arith.constant 0 : index
    %c0_52 = arith.constant 0 : index
    %123 = vector.load %arg14[%c0_51, %c0_52] : memref<16x1xf32, #tpu.memory_space<vmem>>, vector<16x1xf32>
    %124 = vector.broadcast %123 : vector<16x1xf32> to vector<16x4xf32>
    %125 = arith.mulf %122, %124 : vector<16x4xf32>
    %c0_53 = arith.constant 0 : index
    %c0_54 = arith.constant 0 : index
    %126 = vector.load %arg15[%c0_53, %c0_54] : memref<16x1xf32, #tpu.memory_space<vmem>>, vector<16x1xf32>
    %127 = vector.broadcast %126 : vector<16x1xf32> to vector<16x4xf32>
    %128 = arith.addf %125, %127 : vector<16x4xf32>
    %cst_55 = arith.constant 0.000000e+00 : f32
    %129 = vector.broadcast %cst_55 : f32 to vector<16x4xf32>
    %130 = arith.maximumf %128, %129 : vector<16x4xf32>
    %c0_56 = arith.constant 0 : index
    %c0_57 = arith.constant 0 : index
    %131 = vector.load %arg16[%c0_56, %c0_57] : memref<16x48xf32, #tpu.memory_space<vmem>>, vector<16x48xf32>
    %c0_58 = arith.constant 0 : index
    %c0_59 = arith.constant 0 : index
    %132 = vector.load %arg17[%c0_58, %c0_59] : memref<16x1xf32, #tpu.memory_space<vmem>>, vector<16x1xf32>
    %cst_60 = arith.constant 0.000000e+00 : f32
    %133 = vector.broadcast %cst_60 : f32 to vector<16x1xf32>
    %134 = tpu.concatenate %133, %130, %133 in 1 : vector<16x1xf32>, vector<16x4xf32>, vector<16x1xf32> -> vector<16x6xf32>
    %135 = vector.extract_strided_slice %134 {offsets = [0, 0], sizes = [16, 4], strides = [1, 1]} : vector<16x6xf32> to vector<16x4xf32>
    %136 = vector.extract_strided_slice %134 {offsets = [0, 1], sizes = [16, 4], strides = [1, 1]} : vector<16x6xf32> to vector<16x4xf32>
    %137 = vector.extract_strided_slice %134 {offsets = [0, 2], sizes = [16, 4], strides = [1, 1]} : vector<16x6xf32> to vector<16x4xf32>
    %138 = tpu.concatenate %135, %136, %137 in 0 : vector<16x4xf32>, vector<16x4xf32>, vector<16x4xf32> -> vector<48x4xf32>
    %cst_61 = arith.constant dense<0.000000e+00> : vector<16x4xf32>
    %139 = tpu.matmul %131, %138, %cst_61 {dimension_numbers = #tpu.dot_dimension_numbers<[1], [0], [0], [1], [0, 0, 1, 1], [], []>} : vector<16x48xf32>, vector<48x4xf32>, vector<16x4xf32> -> vector<16x4xf32>
    %140 = vector.broadcast %132 : vector<16x1xf32> to vector<16x4xf32>
    %141 = arith.addf %139, %140 : vector<16x4xf32>
    %c0_62 = arith.constant 0 : index
    %c0_63 = arith.constant 0 : index
    %142 = vector.load %arg18[%c0_62, %c0_63] : memref<16x1xf32, #tpu.memory_space<vmem>>, vector<16x1xf32>
    %143 = vector.broadcast %142 : vector<16x1xf32> to vector<16x4xf32>
    %144 = arith.mulf %141, %143 : vector<16x4xf32>
    %c0_64 = arith.constant 0 : index
    %c0_65 = arith.constant 0 : index
    %145 = vector.load %arg19[%c0_64, %c0_65] : memref<16x1xf32, #tpu.memory_space<vmem>>, vector<16x1xf32>
    %146 = vector.broadcast %145 : vector<16x1xf32> to vector<16x4xf32>
    %147 = arith.addf %144, %146 : vector<16x4xf32>
    %cst_66 = arith.constant 0.000000e+00 : f32
    %148 = vector.broadcast %cst_66 : f32 to vector<16x4xf32>
    %149 = arith.maximumf %147, %148 : vector<16x4xf32>
    %c0_67 = arith.constant 0 : index
    %c0_68 = arith.constant 0 : index
    %150 = vector.load %arg20[%c0_67, %c0_68] : memref<16x48xf32, #tpu.memory_space<vmem>>, vector<16x48xf32>
    %c0_69 = arith.constant 0 : index
    %c0_70 = arith.constant 0 : index
    %151 = vector.load %arg21[%c0_69, %c0_70] : memref<16x1xf32, #tpu.memory_space<vmem>>, vector<16x1xf32>
    %cst_71 = arith.constant 0.000000e+00 : f32
    %152 = vector.broadcast %cst_71 : f32 to vector<16x1xf32>
    %153 = tpu.concatenate %152, %149, %152 in 1 : vector<16x1xf32>, vector<16x4xf32>, vector<16x1xf32> -> vector<16x6xf32>
    %154 = vector.extract_strided_slice %153 {offsets = [0, 0], sizes = [16, 4], strides = [1, 1]} : vector<16x6xf32> to vector<16x4xf32>
    %155 = vector.extract_strided_slice %153 {offsets = [0, 1], sizes = [16, 4], strides = [1, 1]} : vector<16x6xf32> to vector<16x4xf32>
    %156 = vector.extract_strided_slice %153 {offsets = [0, 2], sizes = [16, 4], strides = [1, 1]} : vector<16x6xf32> to vector<16x4xf32>
    %157 = tpu.concatenate %154, %155, %156 in 0 : vector<16x4xf32>, vector<16x4xf32>, vector<16x4xf32> -> vector<48x4xf32>
    %cst_72 = arith.constant dense<0.000000e+00> : vector<16x4xf32>
    %158 = tpu.matmul %150, %157, %cst_72 {dimension_numbers = #tpu.dot_dimension_numbers<[1], [0], [0], [1], [0, 0, 1, 1], [], []>} : vector<16x48xf32>, vector<48x4xf32>, vector<16x4xf32> -> vector<16x4xf32>
    %159 = vector.broadcast %151 : vector<16x1xf32> to vector<16x4xf32>
    %160 = arith.addf %158, %159 : vector<16x4xf32>
    %161 = arith.addf %122, %160 : vector<16x4xf32>
    %c0_73 = arith.constant 0 : index
    %c0_74 = arith.constant 0 : index
    %c0_75 = arith.constant 0 : index
    %162 = vector.load %arg22[%c0_73, %c0_74, %c0_75] : memref<1x16x4xf32, #tpu.memory_space<vmem>>, vector<1x16x4xf32>
    %163 = vector.shape_cast %162 : vector<1x16x4xf32> to vector<16x4xf32>
    %164 = vector.shape_cast %161 : vector<16x4xf32> to vector<1x16x4xf32>
    tpu.vector_store %arg22[%c0_73, %c0_74, %c0_75], %164 {strides = array<i32>} : memref<1x16x4xf32, #tpu.memory_space<vmem>>, vector<1x16x4xf32>,
    return
  }
  func.func @transform_0(%arg0: i32) -> (i32, i32, i32) {
    %c0_i32 = arith.constant 0 : i32
    %c0_i32_0 = arith.constant 0 : i32
    %c0_i32_1 = arith.constant 0 : i32
    return %arg0, %c0_i32, %c0_i32_0 : i32, i32, i32
  }
  func.func @transform_1(%arg0: i32) -> (i32, i32) {
    %c0_i32 = arith.constant 0 : i32
    %c0_i32_0 = arith.constant 0 : i32
    %c0_i32_1 = arith.constant 0 : i32
    return %c0_i32, %c0_i32_0 : i32, i32
  }
  func.func @transform_2(%arg0: i32) -> (i32, i32) {
    %c0_i32 = arith.constant 0 : i32
    %c0_i32_0 = arith.constant 0 : i32
    %c0_i32_1 = arith.constant 0 : i32
    return %c0_i32, %c0_i32_0 : i32, i32
  }
  func.func @transform_3(%arg0: i32) -> (i32, i32) {
    %c0_i32 = arith.constant 0 : i32
    %c0_i32_0 = arith.constant 0 : i32
    %c0_i32_1 = arith.constant 0 : i32
    return %c0_i32, %c0_i32_0 : i32, i32
  }
  func.func @transform_4(%arg0: i32) -> (i32, i32) {
    %c0_i32 = arith.constant 0 : i32
    %c0_i32_0 = arith.constant 0 : i32
    %c0_i32_1 = arith.constant 0 : i32
    return %c0_i32, %c0_i32_0 : i32, i32
  }
  func.func @transform_5(%arg0: i32) -> (i32, i32) {
    %c0_i32 = arith.constant 0 : i32
    %c0_i32_0 = arith.constant 0 : i32
    %c0_i32_1 = arith.constant 0 : i32
    return %c0_i32, %c0_i32_0 : i32, i32
  }
  func.func @transform_6(%arg0: i32) -> (i32, i32) {
    %c0_i32 = arith.constant 0 : i32
    %c0_i32_0 = arith.constant 0 : i32
    %c0_i32_1 = arith.constant 0 : i32
    return %c0_i32, %c0_i32_0 : i32, i32
  }
  func.func @transform_7(%arg0: i32) -> (i32, i32) {
    %c0_i32 = arith.constant 0 : i32
    %c0_i32_0 = arith.constant 0 : i32
    %c0_i32_1 = arith.constant 0 : i32
    return %c0_i32, %c0_i32_0 : i32, i32
  }
  func.func @transform_8(%arg0: i32) -> (i32, i32) {
    %c0_i32 = arith.constant 0 : i32
    %c0_i32_0 = arith.constant 0 : i32
    %c0_i32_1 = arith.constant 0 : i32
    return %c0_i32, %c0_i32_0 : i32, i32
  }
  func.func @transform_9(%arg0: i32) -> (i32, i32) {
    %c0_i32 = arith.constant 0 : i32
    %c0_i32_0 = arith.constant 0 : i32
    %c0_i32_1 = arith.constant 0 : i32
    return %c0_i32, %c0_i32_0 : i32, i32
  }
  func.func @transform_10(%arg0: i32) -> (i32, i32) {
    %c0_i32 = arith.constant 0 : i32
    %c0_i32_0 = arith.constant 0 : i32
    %c0_i32_1 = arith.constant 0 : i32
    return %c0_i32, %c0_i32_0 : i32, i32
  }
  func.func @transform_11(%arg0: i32) -> (i32, i32) {
    %c0_i32 = arith.constant 0 : i32
    %c0_i32_0 = arith.constant 0 : i32
    %c0_i32_1 = arith.constant 0 : i32
    return %c0_i32, %c0_i32_0 : i32, i32
  }
  func.func @transform_12(%arg0: i32) -> (i32, i32) {
    %c0_i32 = arith.constant 0 : i32
    %c0_i32_0 = arith.constant 0 : i32
    %c0_i32_1 = arith.constant 0 : i32
    return %c0_i32, %c0_i32_0 : i32, i32
  }
  func.func @transform_13(%arg0: i32) -> (i32, i32) {
    %c0_i32 = arith.constant 0 : i32
    %c0_i32_0 = arith.constant 0 : i32
    %c0_i32_1 = arith.constant 0 : i32
    return %c0_i32, %c0_i32_0 : i32, i32
  }
  func.func @transform_14(%arg0: i32) -> (i32, i32) {
    %c0_i32 = arith.constant 0 : i32
    %c0_i32_0 = arith.constant 0 : i32
    %c0_i32_1 = arith.constant 0 : i32
    return %c0_i32, %c0_i32_0 : i32, i32
  }
  func.func @transform_15(%arg0: i32) -> (i32, i32) {
    %c0_i32 = arith.constant 0 : i32
    %c0_i32_0 = arith.constant 0 : i32
    %c0_i32_1 = arith.constant 0 : i32
    return %c0_i32, %c0_i32_0 : i32, i32
  }
  func.func @transform_16(%arg0: i32) -> (i32, i32) {
    %c0_i32 = arith.constant 0 : i32
    %c0_i32_0 = arith.constant 0 : i32
    %c0_i32_1 = arith.constant 0 : i32
    return %c0_i32, %c0_i32_0 : i32, i32
  }
  func.func @transform_17(%arg0: i32) -> (i32, i32) {
    %c0_i32 = arith.constant 0 : i32
    %c0_i32_0 = arith.constant 0 : i32
    %c0_i32_1 = arith.constant 0 : i32
    return %c0_i32, %c0_i32_0 : i32, i32
  }
  func.func @transform_18(%arg0: i32) -> (i32, i32) {
    %c0_i32 = arith.constant 0 : i32
    %c0_i32_0 = arith.constant 0 : i32
    %c0_i32_1 = arith.constant 0 : i32
    return %c0_i32, %c0_i32_0 : i32, i32
  }
  func.func @transform_19(%arg0: i32) -> (i32, i32) {
    %c0_i32 = arith.constant 0 : i32
    %c0_i32_0 = arith.constant 0 : i32
    %c0_i32_1 = arith.constant 0 : i32
    return %c0_i32, %c0_i32_0 : i32, i32
  }
  func.func @transform_20(%arg0: i32) -> (i32, i32) {
    %c0_i32 = arith.constant 0 : i32
    %c0_i32_0 = arith.constant 0 : i32
    %c0_i32_1 = arith.constant 0 : i32
    return %c0_i32, %c0_i32_0 : i32, i32
  }
  func.func @transform_21(%arg0: i32) -> (i32, i32, i32) {
    %c0_i32 = arith.constant 0 : i32
    %c0_i32_0 = arith.constant 0 : i32
    %c0_i32_1 = arith.constant 0 : i32
    return %arg0, %c0_i32, %c0_i32_0 : i32, i32, i32
  }
}

</mosaic_0001>

<llo_original>
// kernel: tpu_custom_call.1
$region0: #{tpu_custom_call.1}
  #allocation0 [shape = 'u32[]', space=smem, size = 0x4, offset = 0x4, fixed_abs, tag = 'smem constant byte address 0x4 - core index']
  #allocation1 [shape = 'u32[144,128]{1,0:T(1,128)}', space=vmem, size = 0x12000, scoped, tag = 'internal scratch']
  %s0 = inlined_call_operand.vmem [shape: f32[2,3,15], index: 0, kind: input, shape index: {}]
  %s1 = inlined_call_operand.vmem [shape: f32[8,9], index: 1, kind: input, shape index: {}]
  %s2 = inlined_call_operand.vmem [shape: f32[8,1], index: 2, kind: input, shape index: {}]
  %s3 = inlined_call_operand.vmem [shape: f32[16,24], index: 3, kind: input, shape index: {}]
  %s4 = inlined_call_operand.vmem [shape: f32[16,1], index: 4, kind: input, shape index: {}]
  %s5 = inlined_call_operand.vmem [shape: f32[16,1], index: 5, kind: input, shape index: {}]
  %s6 = inlined_call_operand.vmem [shape: f32[16,1], index: 6, kind: input, shape index: {}]
  %s7 = inlined_call_operand.vmem [shape: f32[16,48], index: 7, kind: input, shape index: {}]
  %s8 = inlined_call_operand.vmem [shape: f32[16,1], index: 8, kind: input, shape index: {}]
  %s9 = inlined_call_operand.vmem [shape: f32[16,1], index: 9, kind: input, shape index: {}]
  %s10 = inlined_call_operand.vmem [shape: f32[16,1], index: 10, kind: input, shape index: {}]
  %s11 = inlined_call_operand.vmem [shape: f32[16,48], index: 11, kind: input, shape index: {}]
  %s12 = inlined_call_operand.vmem [shape: f32[16,1], index: 12, kind: input, shape index: {}]
  %s13 = inlined_call_operand.vmem [shape: f32[16,1], index: 13, kind: input, shape index: {}]
  %s14 = inlined_call_operand.vmem [shape: f32[16,1], index: 14, kind: input, shape index: {}]
  %s15 = inlined_call_operand.vmem [shape: f32[16,48], index: 15, kind: input, shape index: {}]
  %s16 = inlined_call_operand.vmem [shape: f32[16,1], index: 16, kind: input, shape index: {}]
  %s17 = inlined_call_operand.vmem [shape: f32[16,1], index: 17, kind: input, shape index: {}]
  %s18 = inlined_call_operand.vmem [shape: f32[16,1], index: 18, kind: input, shape index: {}]
  %s19 = inlined_call_operand.vmem [shape: f32[16,48], index: 19, kind: input, shape index: {}]
  %s20 = inlined_call_operand.vmem [shape: f32[16,1], index: 20, kind: input, shape index: {}]
  %s21 = inlined_call_operand.vmem [shape: f32[2,16,4], index: 21, kind: output, shape index: {}]
  %s22 = sld [smem:[#allocation0]]
  $region117: #{tpu_custom_call.1} parent=0
    _
  %s24 = ssub.s32 1, %s22
  %s25 = scalar_select 0, %s24, %s22
  loop: start=0, step=1, limit=4
  $region2: #{tpu_custom_call.1} parent=0 // loop_pre_header
    _
  $region3: #{tpu_custom_call.1} parent=0 // loop_header
    %s27 = sphi 0, %s31
    %p28 = scmp.ge.s32.totalorder %s27, 4
    %s37 = sphi 0, %s39
    %s40 = sphi 0, %s37
    %s41 = sphi 0, %s40
    %s57 = sphi 0, %s41
    %s61 = sphi 0, %s61
    %s63 = sphi 0, %s61
    %s64 = sphi 0, %s63
    %s78 = sphi 0, %s64
    %s82 = sphi 0, %s82
    %s84 = sphi 0, %s82
    %s85 = sphi 0, %s84
    %s99 = sphi 0, %s85
    %s103 = sphi 0, %s103
    %s105 = sphi 0, %s103
    %s106 = sphi 0, %s105
    %s120 = sphi 0, %s106
    %s124 = sphi 0, %s124
    %s126 = sphi 0, %s124
    %s127 = sphi 0, %s126
    %s141 = sphi 0, %s127
    %s145 = sphi 0, %s145
    %s147 = sphi 0, %s145
    %s148 = sphi 0, %s147
    %s162 = sphi 0, %s148
    %s166 = sphi 0, %s166
    %s168 = sphi 0, %s166
    %s169 = sphi 0, %s168
    %s183 = sphi 0, %s169
    %s187 = sphi 0, %s187
    %s189 = sphi 0, %s187
    %s190 = sphi 0, %s189
    %s204 = sphi 0, %s190
    %s208 = sphi 0, %s208
    %s210 = sphi 0, %s208
    %s211 = sphi 0, %s210
    %s225 = sphi 0, %s211
    %s229 = sphi 0, %s229
    %s231 = sphi 0, %s229
    %s232 = sphi 0, %s231
    %s246 = sphi 0, %s232
    %s250 = sphi 0, %s250
    %s252 = sphi 0, %s250
    %s253 = sphi 0, %s252
    %s267 = sphi 0, %s253
    %s271 = sphi 0, %s271
    %s273 = sphi 0, %s271
    %s274 = sphi 0, %s273
    %s288 = sphi 0, %s274
    %s292 = sphi 0, %s292
    %s294 = sphi 0, %s292
    %s295 = sphi 0, %s294
    %s309 = sphi 0, %s295
    %s313 = sphi 0, %s313
    %s315 = sphi 0, %s313
    %s316 = sphi 0, %s315
    %s330 = sphi 0, %s316
    %s334 = sphi 0, %s334
    %s336 = sphi 0, %s334
    %s337 = sphi 0, %s336
    %s351 = sphi 0, %s337
    %s355 = sphi 0, %s355
    %s357 = sphi 0, %s355
    %s358 = sphi 0, %s357
    %s372 = sphi 0, %s358
    %s376 = sphi 0, %s376
    %s378 = sphi 0, %s376
    %s379 = sphi 0, %s378
    %s393 = sphi 0, %s379
    %s397 = sphi 0, %s397
    %s399 = sphi 0, %s397
    %s400 = sphi 0, %s399
    %s414 = sphi 0, %s400
    %s418 = sphi 0, %s418
    %s420 = sphi 0, %s418
    %s421 = sphi 0, %s420
    %s435 = sphi 0, %s421
    %s439 = sphi 0, %s439
    %s441 = sphi 0, %s439
    %s442 = sphi 0, %s441
    %s456 = sphi 0, %s442
    %s460 = sphi 0, %s460
    %s462 = sphi 0, %s460
    %s463 = sphi 0, %s462
    %s477 = sphi 0, %s463
    %s483 = sphi 0, %s485
    %s486 = sphi 0, %s483
    %s487 = sphi 0, %s486
    %s503 = sphi 0, %s487
  $region4: #{tpu_custom_call.1} parent=0 // loop_header_branch
    %30 = sbr.rel (%p28) target = $region8
  $region5: #{tpu_custom_call.1} parent=0 // loop_body
    %s32 = ssub.s32 %s27, 1
    %s33 = ssub.s32 %s27, 2
    %s34 = sadd.s32 %s27, 1
    %s35 = ssub.s32 %s27, %s34
    %p36 = scmp.eq.s32.totalorder %s35, 0
    %s38 = sadd.s32 %s37, 1
    %s39 = scalar_select %p36, %s37, %s38
    %p42 = pneg %p36
    %p43 = scmp.eq.s32.totalorder %s27, 1
    %p44 = por %p42, %p43
    %p45 = scmp.ne.s32.totalorder %s37, %s40
    %p46 = scmp.eq.s32.totalorder %s27, 0
    %p47 = por %p45, %p46
    %p48 = scmp.ne.s32.totalorder %s37, %s40
    %p49 = scmp.eq.s32.totalorder %s32, 1
    %p50 = por %p48, %p49
    %p51 = scmp.ne.s32.totalorder %s40, %s41
    %p52 = scmp.eq.s32.totalorder %s32, 0
    %p53 = por %p51, %p52
    %p54 = scmp.ne.s32.totalorder %s40, %s41
    %p55 = scmp.eq.s32.totalorder %s33, 1
    %p56 = por %p54, %p55
    %p58 = scmp.ne.s32.totalorder %s41, %s57
    %p59 = scmp.eq.s32.totalorder %s33, 0
    %p60 = por %p58, %p59
    %s62 = sadd.s32 %s61, 1
    %p65 = scmp.eq.s32.totalorder %s27, 1
    %p66 = scmp.ne.s32.totalorder %s61, %s63
    %p67 = scmp.eq.s32.totalorder %s27, 0
    %p68 = por %p66, %p67
    %p69 = scmp.ne.s32.totalorder %s61, %s63
    %p70 = scmp.eq.s32.totalorder %s32, 1
    %p71 = por %p69, %p70
    %p72 = scmp.ne.s32.totalorder %s63, %s64
    %p73 = scmp.eq.s32.totalorder %s32, 0
    %p74 = por %p72, %p73
    %p75 = scmp.ne.s32.totalorder %s63, %s64
    %p76 = scmp.eq.s32.totalorder %s33, 1
    %p77 = por %p75, %p76
    %p79 = scmp.ne.s32.totalorder %s64, %s78
    %p80 = scmp.eq.s32.totalorder %s33, 0
    %p81 = por %p79, %p80
    %s83 = sadd.s32 %s82, 1
    %p86 = scmp.eq.s32.totalorder %s27, 1
    %p87 = scmp.ne.s32.totalorder %s82, %s84
    %p88 = scmp.eq.s32.totalorder %s27, 0
    %p89 = por %p87, %p88
    %p90 = scmp.ne.s32.totalorder %s82, %s84
    %p91 = scmp.eq.s32.totalorder %s32, 1
    %p92 = por %p90, %p91
    %p93 = scmp.ne.s32.totalorder %s84, %s85
    %p94 = scmp.eq.s32.totalorder %s32, 0
    %p95 = por %p93, %p94
    %p96 = scmp.ne.s32.totalorder %s84, %s85
    %p97 = scmp.eq.s32.totalorder %s33, 1
    %p98 = por %p96, %p97
    %p100 = scmp.ne.s32.totalorder %s85, %s99
    %p101 = scmp.eq.s32.totalorder %s33, 0
    %p102 = por %p100, %p101
    %s104 = sadd.s32 %s103, 1
    %p107 = scmp.eq.s32.totalorder %s27, 1
    %p108 = scmp.ne.s32.totalorder %s103, %s105
    %p109 = scmp.eq.s32.totalorder %s27, 0
    %p110 = por %p108, %p109
    %p111 = scmp.ne.s32.totalorder %s103, %s105
    %p112 = scmp.eq.s32.totalorder %s32, 1
    %p113 = por %p111, %p112
    %p114 = scmp.ne.s32.totalorder %s105, %s106
    %p115 = scmp.eq.s32.totalorder %s32, 0
    %p116 = por %p114, %p115
    %p117 = scmp.ne.s32.totalorder %s105, %s106
    %p118 = scmp.eq.s32.totalorder %s33, 1
    %p119 = por %p117, %p118
    %p121 = scmp.ne.s32.totalorder %s106, %s120
    %p122 = scmp.eq.s32.totalorder %s33, 0
    %p123 = por %p121, %p122
    %s125 = sadd.s32 %s124, 1
    %p128 = scmp.eq.s32.totalorder %s27, 1
    %p129 = scmp.ne.s32.totalorder %s124, %s126
    %p130 = scmp.eq.s32.totalorder %s27, 0
    %p131 = por %p129, %p130
    %p132 = scmp.ne.s32.totalorder %s124, %s126
    %p133 = scmp.eq.s32.totalorder %s32, 1
    %p134 = por %p132, %p133
    %p135 = scmp.ne.s32.totalorder %s126, %s127
    %p136 = scmp.eq.s32.totalorder %s32, 0
    %p137 = por %p135, %p136
    %p138 = scmp.ne.s32.totalorder %s126, %s127
    %p139 = scmp.eq.s32.totalorder %s33, 1
    %p140 = por %p138, %p139
    %p142 = scmp.ne.s32.totalorder %s127, %s141
    %p143 = scmp.eq.s32.totalorder %s33, 0
    %p144 = por %p142, %p143
    %s146 = sadd.s32 %s145, 1
    %p149 = scmp.eq.s32.totalorder %s27, 1
    %p150 = scmp.ne.s32.totalorder %s145, %s147
    %p151 = scmp.eq.s32.totalorder %s27, 0
    %p152 = por %p150, %p151
    %p153 = scmp.ne.s32.totalorder %s145, %s147
    %p154 = scmp.eq.s32.totalorder %s32, 1
    %p155 = por %p153, %p154
    %p156 = scmp.ne.s32.totalorder %s147, %s148
    %p157 = scmp.eq.s32.totalorder %s32, 0
    %p158 = por %p156, %p157
    %p159 = scmp.ne.s32.totalorder %s147, %s148
    %p160 = scmp.eq.s32.totalorder %s33, 1
    %p161 = por %p159, %p160
    %p163 = scmp.ne.s32.totalorder %s148, %s162
    %p164 = scmp.eq.s32.totalorder %s33, 0
    %p165 = por %p163, %p164
    %s167 = sadd.s32 %s166, 1
    %p170 = scmp.eq.s32.totalorder %s27, 1
    %p171 = scmp.ne.s32.totalorder %s166, %s168
    %p172 = scmp.eq.s32.totalorder %s27, 0
    %p173 = por %p171, %p172
    %p174 = scmp.ne.s32.totalorder %s166, %s168
    %p175 = scmp.eq.s32.totalorder %s32, 1
    %p176 = por %p174, %p175
    %p177 = scmp.ne.s32.totalorder %s168, %s169
    %p178 = scmp.eq.s32.totalorder %s32, 0
    %p179 = por %p177, %p178
    %p180 = scmp.ne.s32.totalorder %s168, %s169
    %p181 = scmp.eq.s32.totalorder %s33, 1
    %p182 = por %p180, %p181
    %p184 = scmp.ne.s32.totalorder %s169, %s183
    %p185 = scmp.eq.s32.totalorder %s33, 0
    %p186 = por %p184, %p185
    %s188 = sadd.s32 %s187, 1
    %p191 = scmp.eq.s32.totalorder %s27, 1
    %p192 = scmp.ne.s32.totalorder %s187, %s189
    %p193 = scmp.eq.s32.totalorder %s27, 0
    %p194 = por %p192, %p193
    %p195 = scmp.ne.s32.totalorder %s187, %s189
    %p196 = scmp.eq.s32.totalorder %s32, 1
    %p197 = por %p195, %p196
    %p198 = scmp.ne.s32.totalorder %s189, %s190
    %p199 = scmp.eq.s32.totalorder %s32, 0
    %p200 = por %p198, %p199
    %p201 = scmp.ne.s32.totalorder %s189, %s190
    %p202 = scmp.eq.s32.totalorder %s33, 1
    %p203 = por %p201, %p202
    %p205 = scmp.ne.s32.totalorder %s190, %s204
    %p206 = scmp.eq.s32.totalorder %s33, 0
    %p207 = por %p205, %p206
    %s209 = sadd.s32 %s208, 1
    %p212 = scmp.eq.s32.totalorder %s27, 1
    %p213 = scmp.ne.s32.totalorder %s208, %s210
    %p214 = scmp.eq.s32.totalorder %s27, 0
    %p215 = por %p213, %p214
    %p216 = scmp.ne.s32.totalorder %s208, %s210
    %p217 = scmp.eq.s32.totalorder %s32, 1
    %p218 = por %p216, %p217
    %p219 = scmp.ne.s32.totalorder %s210, %s211
    %p220 = scmp.eq.s32.totalorder %s32, 0
    %p221 = por %p219, %p220
    %p222 = scmp.ne.s32.totalorder %s210, %s211
    %p223 = scmp.eq.s32.totalorder %s33, 1
    %p224 = por %p222, %p223
    %p226 = scmp.ne.s32.totalorder %s211, %s225
    %p227 = scmp.eq.s32.totalorder %s33, 0
    %p228 = por %p226, %p227
    %s230 = sadd.s32 %s229, 1
    %p233 = scmp.eq.s32.totalorder %s27, 1
    %p234 = scmp.ne.s32.totalorder %s229, %s231
    %p235 = scmp.eq.s32.totalorder %s27, 0
    %p236 = por %p234, %p235
    %p237 = scmp.ne.s32.totalorder %s229, %s231
    %p238 = scmp.eq.s32.totalorder %s32, 1
    %p239 = por %p237, %p238
    %p240 = scmp.ne.s32.totalorder %s231, %s232
    %p241 = scmp.eq.s32.totalorder %s32, 0
    %p242 = por %p240, %p241
    %p243 = scmp.ne.s32.totalorder %s231, %s232
    %p244 = scmp.eq.s32.totalorder %s33, 1
    %p245 = por %p243, %p244
    %p247 = scmp.ne.s32.totalorder %s232, %s246
    %p248 = scmp.eq.s32.totalorder %s33, 0
    %p249 = por %p247, %p248
    %s251 = sadd.s32 %s250, 1
    %p254 = scmp.eq.s32.totalorder %s27, 1
    %p255 = scmp.ne.s32.totalorder %s250, %s252
    %p256 = scmp.eq.s32.totalorder %s27, 0
    %p257 = por %p255, %p256
    %p258 = scmp.ne.s32.totalorder %s250, %s252
    %p259 = scmp.eq.s32.totalorder %s32, 1
    %p260 = por %p258, %p259
    %p261 = scmp.ne.s32.totalorder %s252, %s253
    %p262 = scmp.eq.s32.totalorder %s32, 0
    %p263 = por %p261, %p262
    %p264 = scmp.ne.s32.totalorder %s252, %s253
    %p265 = scmp.eq.s32.totalorder %s33, 1
    %p266 = por %p264, %p265
    %p268 = scmp.ne.s32.totalorder %s253, %s267
    %p269 = scmp.eq.s32.totalorder %s33, 0
    %p270 = por %p268, %p269
    %s272 = sadd.s32 %s271, 1
    %p275 = scmp.eq.s32.totalorder %s27, 1
    %p276 = scmp.ne.s32.totalorder %s271, %s273
    %p277 = scmp.eq.s32.totalorder %s27, 0
    %p278 = por %p276, %p277
    %p279 = scmp.ne.s32.totalorder %s271, %s273
    %p280 = scmp.eq.s32.totalorder %s32, 1
    %p281 = por %p279, %p280
    %p282 = scmp.ne.s32.totalorder %s273, %s274
    %p283 = scmp.eq.s32.totalorder %s32, 0
    %p284 = por %p282, %p283
    %p285 = scmp.ne.s32.totalorder %s273, %s274
    %p286 = scmp.eq.s32.totalorder %s33, 1
    %p287 = por %p285, %p286
    %p289 = scmp.ne.s32.totalorder %s274, %s288
    %p290 = scmp.eq.s32.totalorder %s33, 0
    %p291 = por %p289, %p290
    %s293 = sadd.s32 %s292, 1
    %p296 = scmp.eq.s32.totalorder %s27, 1
    %p297 = scmp.ne.s32.totalorder %s292, %s294
    %p298 = scmp.eq.s32.totalorder %s27, 0
    %p299 = por %p297, %p298
    %p300 = scmp.ne.s32.totalorder %s292, %s294
    %p301 = scmp.eq.s32.totalorder %s32, 1
    %p302 = por %p300, %p301
    %p303 = scmp.ne.s32.totalorder %s294, %s295
    %p304 = scmp.eq.s32.totalorder %s32, 0
    %p305 = por %p303, %p304
    %p306 = scmp.ne.s32.totalorder %s294, %s295
    %p307 = scmp.eq.s32.totalorder %s33, 1
    %p308 = por %p306, %p307
    %p310 = scmp.ne.s32.totalorder %s295, %s309
    %p311 = scmp.eq.s32.totalorder %s33, 0
    %p312 = por %p310, %p311
    %s314 = sadd.s32 %s313, 1
    %p317 = scmp.eq.s32.totalorder %s27, 1
    %p318 = scmp.ne.s32.totalorder %s313, %s315
    %p319 = scmp.eq.s32.totalorder %s27, 0
    %p320 = por %p318, %p319
    %p321 = scmp.ne.s32.totalorder %s313, %s315
    %p322 = scmp.eq.s32.totalorder %s32, 1
    %p323 = por %p321, %p322
    %p324 = scmp.ne.s32.totalorder %s315, %s316
    %p325 = scmp.eq.s32.totalorder %s32, 0
    %p326 = por %p324, %p325
    %p327 = scmp.ne.s32.totalorder %s315, %s316
    %p328 = scmp.eq.s32.totalorder %s33, 1
    %p329 = por %p327, %p328
    %p331 = scmp.ne.s32.totalorder %s316, %s330
    %p332 = scmp.eq.s32.totalorder %s33, 0
    %p333 = por %p331, %p332
    %s335 = sadd.s32 %s334, 1
    %p338 = scmp.eq.s32.totalorder %s27, 1
    %p339 = scmp.ne.s32.totalorder %s334, %s336
    %p340 = scmp.eq.s32.totalorder %s27, 0
    %p341 = por %p339, %p340
    %p342 = scmp.ne.s32.totalorder %s334, %s336
    %p343 = scmp.eq.s32.totalorder %s32, 1
    %p344 = por %p342, %p343
    %p345 = scmp.ne.s32.totalorder %s336, %s337
    %p346 = scmp.eq.s32.totalorder %s32, 0
    %p347 = por %p345, %p346
    %p348 = scmp.ne.s32.totalorder %s336, %s337
    %p349 = scmp.eq.s32.totalorder %s33, 1
    %p350 = por %p348, %p349
    %p352 = scmp.ne.s32.totalorder %s337, %s351
    %p353 = scmp.eq.s32.totalorder %s33, 0
    %p354 = por %p352, %p353
    %s356 = sadd.s32 %s355, 1
    %p359 = scmp.eq.s32.totalorder %s27, 1
    %p360 = scmp.ne.s32.totalorder %s355, %s357
    %p361 = scmp.eq.s32.totalorder %s27, 0
    %p362 = por %p360, %p361
    %p363 = scmp.ne.s32.totalorder %s355, %s357
    %p364 = scmp.eq.s32.totalorder %s32, 1
    %p365 = por %p363, %p364
    %p366 = scmp.ne.s32.totalorder %s357, %s358
    %p367 = scmp.eq.s32.totalorder %s32, 0
    %p368 = por %p366, %p367
    %p369 = scmp.ne.s32.totalorder %s357, %s358
    %p370 = scmp.eq.s32.totalorder %s33, 1
    %p371 = por %p369, %p370
    %p373 = scmp.ne.s32.totalorder %s358, %s372
    %p374 = scmp.eq.s32.totalorder %s33, 0
    %p375 = por %p373, %p374
    %s377 = sadd.s32 %s376, 1
    %p380 = scmp.eq.s32.totalorder %s27, 1
    %p381 = scmp.ne.s32.totalorder %s376, %s378
    %p382 = scmp.eq.s32.totalorder %s27, 0
    %p383 = por %p381, %p382
    %p384 = scmp.ne.s32.totalorder %s376, %s378
    %p385 = scmp.eq.s32.totalorder %s32, 1
    %p386 = por %p384, %p385
    %p387 = scmp.ne.s32.totalorder %s378, %s379
    %p388 = scmp.eq.s32.totalorder %s32, 0
    %p389 = por %p387, %p388
    %p390 = scmp.ne.s32.totalorder %s378, %s379
    %p391 = scmp.eq.s32.totalorder %s33, 1
    %p392 = por %p390, %p391
    %p394 = scmp.ne.s32.totalorder %s379, %s393
    %p395 = scmp.eq.s32.totalorder %s33, 0
    %p396 = por %p394, %p395
    %s398 = sadd.s32 %s397, 1
    %p401 = scmp.eq.s32.totalorder %s27, 1
    %p402 = scmp.ne.s32.totalorder %s397, %s399
    %p403 = scmp.eq.s32.totalorder %s27, 0
    %p404 = por %p402, %p403
    %p405 = scmp.ne.s32.totalorder %s397, %s399
    %p406 = scmp.eq.s32.totalorder %s32, 1
    %p407 = por %p405, %p406
    %p408 = scmp.ne.s32.totalorder %s399, %s400
    %p409 = scmp.eq.s32.totalorder %s32, 0
    %p410 = por %p408, %p409
    %p411 = scmp.ne.s32.totalorder %s399, %s400
    %p412 = scmp.eq.s32.totalorder %s33, 1
    %p413 = por %p411, %p412
    %p415 = scmp.ne.s32.totalorder %s400, %s414
    %p416 = scmp.eq.s32.totalorder %s33, 0
    %p417 = por %p415, %p416
    %s419 = sadd.s32 %s418, 1
    %p422 = scmp.eq.s32.totalorder %s27, 1
    %p423 = scmp.ne.s32.totalorder %s418, %s420
    %p424 = scmp.eq.s32.totalorder %s27, 0
    %p425 = por %p423, %p424
    %p426 = scmp.ne.s32.totalorder %s418, %s420
    %p427 = scmp.eq.s32.totalorder %s32, 1
    %p428 = por %p426, %p427
    %p429 = scmp.ne.s32.totalorder %s420, %s421
    %p430 = scmp.eq.s32.totalorder %s32, 0
    %p431 = por %p429, %p430
    %p432 = scmp.ne.s32.totalorder %s420, %s421
    %p433 = scmp.eq.s32.totalorder %s33, 1
    %p434 = por %p432, %p433
    %p436 = scmp.ne.s32.totalorder %s421, %s435
    %p437 = scmp.eq.s32.totalorder %s33, 0
    %p438 = por %p436, %p437
    %s440 = sadd.s32 %s439, 1
    %p443 = scmp.eq.s32.totalorder %s27, 1
    %p444 = scmp.ne.s32.totalorder %s439, %s441
    %p445 = scmp.eq.s32.totalorder %s27, 0
    %p446 = por %p444, %p445
    %p447 = scmp.ne.s32.totalorder %s439, %s441
    %p448 = scmp.eq.s32.totalorder %s32, 1
    %p449 = por %p447, %p448
    %p450 = scmp.ne.s32.totalorder %s441, %s442
    %p451 = scmp.eq.s32.totalorder %s32, 0
    %p452 = por %p450, %p451
    %p453 = scmp.ne.s32.totalorder %s441, %s442
    %p454 = scmp.eq.s32.totalorder %s33, 1
    %p455 = por %p453, %p454
    %p457 = scmp.ne.s32.totalorder %s442, %s456
    %p458 = scmp.eq.s32.totalorder %s33, 0
    %p459 = por %p457, %p458
    %s461 = sadd.s32 %s460, 1
    %p464 = scmp.eq.s32.totalorder %s27, 1
    %p465 = scmp.ne.s32.totalorder %s460, %s462
    %p466 = scmp.eq.s32.totalorder %s27, 0
    %p467 = por %p465, %p466
    %p468 = scmp.ne.s32.totalorder %s460, %s462
    %p469 = scmp.eq.s32.totalorder %s32, 1
    %p470 = por %p468, %p469
    %p471 = scmp.ne.s32.totalorder %s462, %s463
    %p472 = scmp.eq.s32.totalorder %s32, 0
    %p473 = por %p471, %p472
    %p474 = scmp.ne.s32.totalorder %s462, %s463
    %p475 = scmp.eq.s32.totalorder %s33, 1
    %p476 = por %p474, %p475
    %p478 = scmp.ne.s32.totalorder %s463, %s477
    %p479 = scmp.eq.s32.totalorder %s33, 0
    %p480 = por %p478, %p479
    %s481 = ssub.s32 %s27, %s34
    %p482 = scmp.eq.s32.totalorder %s481, 0
    %s484 = sadd.s32 %s483, 1
    %s485 = scalar_select %p482, %s483, %s484
    %p488 = pneg %p482
    %p489 = scmp.eq.s32.totalorder %s27, 1
    %p490 = por %p488, %p489
    %p491 = scmp.ne.s32.totalorder %s483, %s486
    %p492 = scmp.eq.s32.totalorder %s27, 0
    %p493 = por %p491, %p492
    %p494 = scmp.ne.s32.totalorder %s483, %s486
    %p495 = scmp.eq.s32.totalorder %s32, 1
    %p496 = por %p494, %p495
    %p497 = scmp.ne.s32.totalorder %s486, %s487
    %p498 = scmp.eq.s32.totalorder %s32, 0
    %p499 = por %p497, %p498
    %p500 = scmp.ne.s32.totalorder %s486, %s487
    %p501 = scmp.eq.s32.totalorder %s33, 1
    %p502 = por %p500, %p501
    %p504 = scmp.ne.s32.totalorder %s487, %s503
    %p505 = scmp.eq.s32.totalorder %s33, 0
    %p506 = por %p504, %p505
    %p507 = scmp.le.s32.totalorder 1, %s27
    %p508 = scmp.lt.s32.totalorder %s27, 3
    %p509 = pnand %p507, %p508
    %p510 = pneg %p509
    // Predicated region
    $region9: #{tpu_custom_call.1} parent=5 // pred_check
      _
    $region10: #{tpu_custom_call.1} parent=5 // pred_check_branch
      %512 = sbr.rel (%p509) target = $region12
    $region11: #{tpu_custom_call.1} parent=5 // pred_region
      %s513 = ssub.s32 %s27, 1
      // Predicated region
      $region13: #{tpu_custom_call.1} parent=11 // pred_check
        %p514 = pneg %p74
      $region14: #{tpu_custom_call.1} parent=11 // pred_check_branch
        %516 = sbr.rel (%p514) target = $region16
      $region15: #{tpu_custom_call.1} parent=11 // pred_region
        _
      $region16: #{tpu_custom_call.1} parent=11 // pred_fallthru
        _
      // Predicated region
      $region17: #{tpu_custom_call.1} parent=11 // pred_check
        %p517 = pneg %p95
      $region18: #{tpu_custom_call.1} parent=11 // pred_check_branch
        %519 = sbr.rel (%p517) target = $region20
      $region19: #{tpu_custom_call.1} parent=11 // pred_region
        _
      $region20: #{tpu_custom_call.1} parent=11 // pred_fallthru
        _
      // Predicated region
      $region21: #{tpu_custom_call.1} parent=11 // pred_check
        %p520 = pneg %p116
      $region22: #{tpu_custom_call.1} parent=11 // pred_check_branch
        %522 = sbr.rel (%p520) target = $region24
      $region23: #{tpu_custom_call.1} parent=11 // pred_region
        _
      $region24: #{tpu_custom_call.1} parent=11 // pred_fallthru
        _
      // Predicated region
      $region25: #{tpu_custom_call.1} parent=11 // pred_check
        %p523 = pneg %p137
      $region26: #{tpu_custom_call.1} parent=11 // pred_check_branch
        %525 = sbr.rel (%p523) target = $region28
      $region27: #{tpu_custom_call.1} parent=11 // pred_region
        _
      $region28: #{tpu_custom_call.1} parent=11 // pred_fallthru
        _
      // Predicated region
      $region29: #{tpu_custom_call.1} parent=11 // pred_check
        %p526 = pneg %p158
      $region30: #{tpu_custom_call.1} parent=11 // pred_check_branch
        %528 = sbr.rel (%p526) target = $region32
      $region31: #{tpu_custom_call.1} parent=11 // pred_region
        _
      $region32: #{tpu_custom_call.1} parent=11 // pred_fallthru
        _
      // Predicated region
      $region33: #{tpu_custom_call.1} parent=11 // pred_check
        %p529 = pneg %p179
      $region34: #{tpu_custom_call.1} parent=11 // pred_check_branch
        %531 = sbr.rel (%p529) target = $region36
      $region35: #{tpu_custom_call.1} parent=11 // pred_region
        _
      $region36: #{tpu_custom_call.1} parent=11 // pred_fallthru
        _
      // Predicated region
      $region37: #{tpu_custom_call.1} parent=11 // pred_check
        %p532 = pneg %p200
      $region38: #{tpu_custom_call.1} parent=11 // pred_check_branch
        %534 = sbr.rel (%p532) target = $region40
      $region39: #{tpu_custom_call.1} parent=11 // pred_region
        _
      $region40: #{tpu_custom_call.1} parent=11 // pred_fallthru
        _
      // Predicated region
      $region41: #{tpu_custom_call.1} parent=11 // pred_check
        %p535 = pneg %p221
      $region42: #{tpu_custom_call.1} parent=11 // pred_check_branch
        %537 = sbr.rel (%p535) target = $region44
      $region43: #{tpu_custom_call.1} parent=11 // pred_region
        _
      $region44: #{tpu_custom_call.1} parent=11 // pred_fallthru
        _
      // Predicated region
      $region45: #{tpu_custom_call.1} parent=11 // pred_check
        %p538 = pneg %p242
      $region46: #{tpu_custom_call.1} parent=11 // pred_check_branch
        %540 = sbr.rel (%p538) target = $region48
      $region47: #{tpu_custom_call.1} parent=11 // pred_region
        _
      $region48: #{tpu_custom_call.1} parent=11 // pred_fallthru
        _
      // Predicated region
      $region49: #{tpu_custom_call.1} parent=11 // pred_check
        %p541 = pneg %p263
      $region50: #{tpu_custom_call.1} parent=11 // pred_check_branch
        %543 = sbr.rel (%p541) target = $region52
      $region51: #{tpu_custom_call.1} parent=11 // pred_region
        _
      $region52: #{tpu_custom_call.1} parent=11 // pred_fallthru
        _
      // Predicated region
      $region53: #{tpu_custom_call.1} parent=11 // pred_check
        %p544 = pneg %p284
      $region54: #{tpu_custom_call.1} parent=11 // pred_check_branch
        %546 = sbr.rel (%p544) target = $region56
      $region55: #{tpu_custom_call.1} parent=11 // pred_region
        _
      $region56: #{tpu_custom_call.1} parent=11 // pred_fallthru
        _
      // Predicated region
      $region57: #{tpu_custom_call.1} parent=11 // pred_check
        %p547 = pneg %p305
      $region58: #{tpu_custom_call.1} parent=11 // pred_check_branch
        %549 = sbr.rel (%p547) target = $region60
      $region59: #{tpu_custom_call.1} parent=11 // pred_region
        _
      $region60: #{tpu_custom_call.1} parent=11 // pred_fallthru
        _
      // Predicated region
      $region61: #{tpu_custom_call.1} parent=11 // pred_check
        %p550 = pneg %p326
      $region62: #{tpu_custom_call.1} parent=11 // pred_check_branch
        %552 = sbr.rel (%p550) target = $region64
      $region63: #{tpu_custom_call.1} parent=11 // pred_region
        _
      $region64: #{tpu_custom_call.1} parent=11 // pred_fallthru
        _
      // Predicated region
      $region65: #{tpu_custom_call.1} parent=11 // pred_check
        %p553 = pneg %p347
      $region66: #{tpu_custom_call.1} parent=11 // pred_check_branch
        %555 = sbr.rel (%p553) target = $region68
      $region67: #{tpu_custom_call.1} parent=11 // pred_region
        _
      $region68: #{tpu_custom_call.1} parent=11 // pred_fallthru
        _
      // Predicated region
      $region69: #{tpu_custom_call.1} parent=11 // pred_check
        %p556 = pneg %p368
      $region70: #{tpu_custom_call.1} parent=11 // pred_check_branch
        %558 = sbr.rel (%p556) target = $region72
      $region71: #{tpu_custom_call.1} parent=11 // pred_region
        _
      $region72: #{tpu_custom_call.1} parent=11 // pred_fallthru
        _
      // Predicated region
      $region73: #{tpu_custom_call.1} parent=11 // pred_check
        %p559 = pneg %p389
      $region74: #{tpu_custom_call.1} parent=11 // pred_check_branch
        %561 = sbr.rel (%p559) target = $region76
      $region75: #{tpu_custom_call.1} parent=11 // pred_region
        _
      $region76: #{tpu_custom_call.1} parent=11 // pred_fallthru
        _
      // Predicated region
      $region77: #{tpu_custom_call.1} parent=11 // pred_check
        %p562 = pneg %p410
      $region78: #{tpu_custom_call.1} parent=11 // pred_check_branch
        %564 = sbr.rel (%p562) target = $region80
      $region79: #{tpu_custom_call.1} parent=11 // pred_region
        _
      $region80: #{tpu_custom_call.1} parent=11 // pred_fallthru
        _
      // Predicated region
      $region81: #{tpu_custom_call.1} parent=11 // pred_check
        %p565 = pneg %p431
      $region82: #{tpu_custom_call.1} parent=11 // pred_check_branch
        %567 = sbr.rel (%p565) target = $region84
      $region83: #{tpu_custom_call.1} parent=11 // pred_region
        _
      $region84: #{tpu_custom_call.1} parent=11 // pred_fallthru
        _
      // Predicated region
      $region85: #{tpu_custom_call.1} parent=11 // pred_check
        %p568 = pneg %p452
      $region86: #{tpu_custom_call.1} parent=11 // pred_check_branch
        %570 = sbr.rel (%p568) target = $region88
      $region87: #{tpu_custom_call.1} parent=11 // pred_region
        _
      $region88: #{tpu_custom_call.1} parent=11 // pred_fallthru
        _
      // Predicated region
      $region89: #{tpu_custom_call.1} parent=11 // pred_check
        %p571 = pneg %p473
      $region90: #{tpu_custom_call.1} parent=11 // pred_check_branch
        %573 = sbr.rel (%p571) target = $region92
      $region91: #{tpu_custom_call.1} parent=11 // pred_region
        _
      $region92: #{tpu_custom_call.1} parent=11 // pred_fallthru
        _
    $region12: #{tpu_custom_call.1} parent=5 // pred_fallthru
      _
    %p574 = scmp.lt.s32.totalorder %s27, 2
    // Predicated region
    $region93: #{tpu_custom_call.1} parent=5 // pred_check
      %p575 = pneg %p574
    $region94: #{tpu_custom_call.1} parent=5 // pred_check_branch
      %577 = sbr.rel (%p575) target = $region96
    $region95: #{tpu_custom_call.1} parent=5 // pred_region
      // Predicated region
      $region97: #{tpu_custom_call.1} parent=95 // pred_check
        %p578 = pneg %p47
      $region98: #{tpu_custom_call.1} parent=95 // pred_check_branch
        %580 = sbr.rel (%p578) target = $region100
      $region99: #{tpu_custom_call.1} parent=95 // pred_region
        %p581 = scmp.lt.s32.totalorder %s27, 1
        %s582 = scalar_select %p581, %s27, 1
        %s583 = smul.addr %s582, 4
        %s584 = scalar_lea.vmem %s0, %s583
      $region100: #{tpu_custom_call.1} parent=95 // pred_fallthru
        _
    $region96: #{tpu_custom_call.1} parent=5 // pred_fallthru
      _
    %p585 = scmp.le.s32.totalorder 1, %s27
    %p586 = scmp.lt.s32.totalorder %s27, 3
    %p587 = pnand %p585, %p586
    %p588 = pneg %p587
    // Predicated region
    $region101: #{tpu_custom_call.1} parent=5 // pred_check
      _
    $region102: #{tpu_custom_call.1} parent=5 // pred_check_branch
      %590 = sbr.rel (%p587) target = $region104
    $region103: #{tpu_custom_call.1} parent=5 // pred_region
      %s591 = ssub.s32 %s27, 1
      %p592 = scmp.lt.s32.totalorder %s32, 1
      %s593 = scalar_select %p592, %s32, 1
      %s594 = smul.addr %s593, 4
      %s595 = scalar_lea.vmem %s0, %s594
      %p596 = pneg %p53
      %p597 = pneg %p50
      %p598 = pneg %p74
      %p599 = pneg %p71
      %p600 = pneg %p95
      %p601 = pneg %p92
      %p602 = pneg %p116
      %p603 = pneg %p113
      %p604 = pneg %p137
      %p605 = pneg %p134
      %p606 = pneg %p158
      %p607 = pneg %p155
      %p608 = pneg %p179
      %p609 = pneg %p176
      %p610 = pneg %p200
      %p611 = pneg %p197
      %p612 = pneg %p221
      %p613 = pneg %p218
      %p614 = pneg %p242
      %p615 = pneg %p239
      %p616 = pneg %p263
      %p617 = pneg %p260
      %p618 = pneg %p284
      %p619 = pneg %p281
      %p620 = pneg %p305
      %p621 = pneg %p302
      %p622 = pneg %p326
      %p623 = pneg %p323
      %p624 = pneg %p347
      %p625 = pneg %p344
      %p626 = pneg %p368
      %p627 = pneg %p365
      %p628 = pneg %p389
      %p629 = pneg %p386
      %p630 = pneg %p410
      %p631 = pneg %p407
      %p632 = pneg %p431
      %p633 = pneg %p428
      %p634 = pneg %p452
      %p635 = pneg %p449
      %p636 = pneg %p473
      %p637 = pneg %p470
      %p638 = pneg %p499
      %p639 = pneg %p496
      %p640 = scmp.lt.s32.totalorder %s32, 1
      %s641 = scalar_select %p640, %s32, 1
      %s642 = smul.addr %s641, 2
      %s643 = smul.addr %s642, 8
      %s644 = scalar_lea.vmem %s21, %s643
      %p645 = scmp.lt.s32.totalorder %s32, 1
      %s646 = scalar_select %p645, %s32, 1
      %s647 = smul.addr %s646, 4
      %s648 = scalar_lea.vmem %s0, %s647
      %p649 = scmp.lt.s32.totalorder %s32, 1
      %s650 = scalar_select %p649, %s32, 1
      %s651 = smul.addr %s650, 2
      %s652 = smul.addr %s651, 8
      %s653 = scalar_lea.vmem %s21, %s652
      %v654 = vld [vmem:[%s648] sm:$0x7]
      %v655 = vld [vmem:[%s1] sm:$0xff]
      %v656 = vld [vmem:[%s2] sm:$0xff]
      %658 = vrot.lane.b32.xlu0 %v654, 1
      %v659 = vpop.permute.xlu0 %658
      %vm661 = vcmask 7168
      %v662 = vsel %vm661, 0.0, %v659
      %vm663 = vcmask 130048
      %v664 = vsel %vm663, %v662, 0.0
      %v666 = vrot.slane %v664, 5
      %667 = vrot.lane.b32.xlu0 %v666, 127
      %v668 = vpop.permute.xlu0 %667
      %v670 = vrot.slane %v664, 2
      %671 = vrot.lane.b32.xlu0 %v670, 126
      %v672 = vpop.permute.xlu0 %671
      %vm674 = vcmask 1042432
      %v675 = vsel %vm674, %v664, %v668
      %vm676 = vcmask 1045504
      %v677 = vsel %vm676, %v675, %v672
      %679 = vset.pattern.permute.xlu0 0
      %680 = vperm.xlu0 %679, %v656
      %v681 = vpop.permute.xlu0 %680
      %vm683 = vcmask 72704
      %v685 = vsel %vm683, %v655, 0
      %vm687 = vcmask 1040384
      %v688 = vsel %vm687, %v672, 0
      %690 = vmatprep.subr.mxu0 0.0
      %691 = vmatpush1.msra.mxu0 %v677
      %692 = vmatprep.subr.mxu0 0.0
      %693 = vmatpush1.msra.mxu0 %v688
      %694 = vmatprep.subr.mxu0 0.0
      %695 = vmatpush1.msra.mxu0 0.0
      %696 = vmatprep.subr.mxu0 0.0
      %697 = vmatpush1.msra.mxu0 0.0
      %698 = vmatprep.subr.mxu0 0.0
      %699 = vmatpush1.msra.mxu0 0.0
      %700 = vmatprep.subr.mxu0 0.0
      %701 = vmatpush1.msra.mxu0 0.0
      %702 = vmatprep.subr.mxu0 0.0
      %703 = vmatpush1.msra.mxu0 0.0
      %704 = vmatprep.subr.mxu0 0.0
      %705 = vmatpush1.msra.mxu0 0.0
      %706 = vmatprep.subr.mxu0 0.0
      %707 = vmatpush1.msra.mxu0 0.0
      %708 = vmatprep.subr.mxu0 0.0
      %709 = vmatpush1.msra.mxu0 0.0
      %710 = vmatprep.subr.mxu0 0.0
      %711 = vmatpush1.msra.mxu0 0.0
      %712 = vmatprep.subr.mxu0 0.0
      %713 = vmatpush1.msra.mxu0 0.0
      %714 = vmatprep.subr.mxu0 0.0
      %715 = vmatpush1.msra.mxu0 0.0
      %716 = vmatprep.subr.mxu0 0.0
      %717 = vmatpush1.msra.mxu0 0.0
      %718 = vmatprep.subr.mxu0 0.0
      %719 = vmatpush1.msra.mxu0 0.0
      %720 = vmatprep.subr.mxu0 0.0
      %721 = vmatpush1.msra.mxu0 0.0
      %722 = vmatprep.subr.mxu0 0.0
      %723 = vmatpush1.msra.mxu0 0.0
      %724 = vmatprep.subr.mxu0 0.0
      %725 = vmatpush1.msra.mxu0 0.0
      %726 = vmatprep.subr.mxu0 0.0
      %727 = vmatpush1.msra.mxu0 0.0
      %728 = vmatprep.subr.mxu0 0.0
      %729 = vmatpush1.msra.mxu0 0.0
      %730 = vmatprep.subr.mxu0 0.0
      %731 = vmatpush1.msra.mxu0 0.0
      %732 = vmatprep.subr.mxu0 0.0
      %733 = vmatpush1.msra.mxu0 0.0
      %734 = vmatprep.subr.mxu0 0.0
      %735 = vmatpush1.msra.mxu0 0.0
      %736 = vmatprep.subr.mxu0 0.0
      %737 = vmatpush1.msra.mxu0 0.0
      %738 = vmatprep.subr.mxu0 0.0
      %739 = vmatpush1.msra.mxu0 0.0
      %740 = vmatprep.subr.mxu0 0.0
      %741 = vmatpush1.msra.mxu0 0.0
      %742 = vmatprep.subr.mxu0 0.0
      %743 = vmatpush1.msra.mxu0 0.0
      %744 = vmatprep.subr.mxu0 0.0
      %745 = vmatpush1.msra.mxu0 0.0
      %746 = vmatprep.subr.mxu0 0.0
      %747 = vmatpush1.msra.mxu0 0.0
      %748 = vmatprep.subr.mxu0 0.0
      %749 = vmatpush1.msra.mxu0 0.0
      %750 = vmatprep.subr.mxu0 0.0
      %751 = vmatpush1.msra.mxu0 0.0
      %752 = vmatprep.subr.mxu0 0.0
      %753 = vmatpush1.msra.mxu0 0.0
      %754 = vmatprep.mubr.f32.mxu0 0.0
      %755 = vmatmul.mubr.f32.gmra.mrb[0].mxu0 %v685
      %v756 = vpop.f32.mrb[0].mxu0
      %v757 = vadd.f32 %v681, %v756
      %v758 = vpop.f32.mrb[0].mxu0
      %759 = vdwg.mxu0
      %v760 = vmax.f32 %v757, 0.0
      %v761 = vlaneseq
      %v762 = vshrl.u32 %v761, 7
      %v763 = vadd.s32 %v762, 8
      %v764 = vlaneseq
      %v765 = vand.u32 %v764, 127
      %v766 = vmul.u32 %v765, 2
      %vm767 = vcmp.eq.s32.totalorder %v762, %v766
      %vm768 = vcmp.eq.s32.totalorder %v763, %v766
      %v769 = vsel %vm767, 1, 0
      %v770 = vsel %vm768, 1, 0
      %v771 = vcvt.s32.f32 %v769
      %v772 = vcvt.s32.f32 %v770
      %v773 = vadd.s32 %v766, 1
      %vm774 = vcmp.eq.s32.totalorder %v762, %v773
      %vm775 = vcmp.eq.s32.totalorder %v763, %v773
      %v776 = vsel %vm774, 1, 0
      %v777 = vsel %vm775, 1, 0
      %v778 = vcvt.s32.f32 %v776
      %v779 = vcvt.s32.f32 %v777
      %vm780 = vcmask 121856
      %v782 = vsel %vm780, %v760, 0
      %vm784 = vcmask 1046528
      %v786 = vsel %vm784, %v772, 0
      %788 = vmatprep.subr.mxu0 0.0
      %789 = vmatpush1.msra.mxu0 %v771
      %790 = vmatprep.subr.mxu0 0.0
      %791 = vmatpush1.msra.mxu0 %v786
      %792 = vmatprep.subr.mxu0 0.0
      %793 = vmatpush1.msra.mxu0 0.0
      %794 = vmatprep.subr.mxu0 0.0
      %795 = vmatpush1.msra.mxu0 0.0
      %796 = vmatprep.subr.mxu0 0.0
      %797 = vmatpush1.msra.mxu0 0.0
      %798 = vmatprep.subr.mxu0 0.0
      %799 = vmatpush1.msra.mxu0 0.0
      %800 = vmatprep.subr.mxu0 0.0
      %801 = vmatpush1.msra.mxu0 0.0
      %802 = vmatprep.subr.mxu0 0.0
      %803 = vmatpush1.msra.mxu0 0.0
      %804 = vmatprep.subr.mxu0 0.0
      %805 = vmatpush1.msra.mxu0 0.0
      %806 = vmatprep.subr.mxu0 0.0
      %807 = vmatpush1.msra.mxu0 0.0
      %808 = vmatprep.subr.mxu0 0.0
      %809 = vmatpush1.msra.mxu0 0.0
      %810 = vmatprep.subr.mxu0 0.0
      %811 = vmatpush1.msra.mxu0 0.0
      %812 = vmatprep.subr.mxu0 0.0
      %813 = vmatpush1.msra.mxu0 0.0
      %814 = vmatprep.subr.mxu0 0.0
      %815 = vmatpush1.msra.mxu0 0.0
      %816 = vmatprep.subr.mxu0 0.0
      %817 = vmatpush1.msra.mxu0 0.0
      %818 = vmatprep.subr.mxu0 0.0
      %819 = vmatpush1.msra.mxu0 0.0
      %820 = vmatprep.subr.mxu0 0.0
      %821 = vmatpush1.msra.mxu0 0.0
      %822 = vmatprep.subr.mxu0 0.0
      %823 = vmatpush1.msra.mxu0 0.0
      %824 = vmatprep.subr.mxu0 0.0
      %825 = vmatpush1.msra.mxu0 0.0
      %826 = vmatprep.subr.mxu0 0.0
      %827 = vmatpush1.msra.mxu0 0.0
      %828 = vmatprep.subr.mxu0 0.0
      %829 = vmatpush1.msra.mxu0 0.0
      %830 = vmatprep.subr.mxu0 0.0
      %831 = vmatpush1.msra.mxu0 0.0
      %832 = vmatprep.subr.mxu0 0.0
      %833 = vmatpush1.msra.mxu0 0.0
      %834 = vmatprep.subr.mxu0 0.0
      %835 = vmatpush1.msra.mxu0 0.0
      %836 = vmatprep.subr.mxu0 0.0
      %837 = vmatpush1.msra.mxu0 0.0
      %838 = vmatprep.subr.mxu0 0.0
      %839 = vmatpush1.msra.mxu0 0.0
      %840 = vmatprep.subr.mxu0 0.0
      %841 = vmatpush1.msra.mxu0 0.0
      %842 = vmatprep.subr.mxu0 0.0
      %843 = vmatpush1.msra.mxu0 0.0
      %844 = vmatprep.subr.mxu0 0.0
      %845 = vmatpush1.msra.mxu0 0.0
      %846 = vmatprep.subr.mxu0 0.0
      %847 = vmatpush1.msra.mxu0 0.0
      %848 = vmatprep.subr.mxu0 0.0
      %849 = vmatpush1.msra.mxu0 0.0
      %850 = vmatprep.subr.mxu0 0.0
      %851 = vmatpush1.msra.mxu0 0.0
      %852 = vmatprep.mubr.f32.mxu0 0.0
      %853 = vmatmul.mubr.f32.gmra.mrb[0].mxu0 %v782
      %v854 = vpop.f32.mrb[0].mxu0
      %v855 = vadd.f32 0.0, %v854
      %v856 = vpop.f32.mrb[0].mxu0
      %857 = vdwg.mxu0
      %v859 = vsel %vm784, %v779, 0
      %861 = vmatprep.subr.mxu0 0.0
      %862 = vmatpush1.msra.mxu0 %v778
      %863 = vmatprep.subr.mxu0 0.0
      %864 = vmatpush1.msra.mxu0 %v859
      %865 = vmatprep.subr.mxu0 0.0
      %866 = vmatpush1.msra.mxu0 0.0
      %867 = vmatprep.subr.mxu0 0.0
      %868 = vmatpush1.msra.mxu0 0.0
      %869 = vmatprep.subr.mxu0 0.0
      %870 = vmatpush1.msra.mxu0 0.0
      %871 = vmatprep.subr.mxu0 0.0
      %872 = vmatpush1.msra.mxu0 0.0
      %873 = vmatprep.subr.mxu0 0.0
      %874 = vmatpush1.msra.mxu0 0.0
      %875 = vmatprep.subr.mxu0 0.0
      %876 = vmatpush1.msra.mxu0 0.0
      %877 = vmatprep.subr.mxu0 0.0
      %878 = vmatpush1.msra.mxu0 0.0
      %879 = vmatprep.subr.mxu0 0.0
      %880 = vmatpush1.msra.mxu0 0.0
      %881 = vmatprep.subr.mxu0 0.0
      %882 = vmatpush1.msra.mxu0 0.0
      %883 = vmatprep.subr.mxu0 0.0
      %884 = vmatpush1.msra.mxu0 0.0
      %885 = vmatprep.subr.mxu0 0.0
      %886 = vmatpush1.msra.mxu0 0.0
      %887 = vmatprep.subr.mxu0 0.0
      %888 = vmatpush1.msra.mxu0 0.0
      %889 = vmatprep.subr.mxu0 0.0
      %890 = vmatpush1.msra.mxu0 0.0
      %891 = vmatprep.subr.mxu0 0.0
      %892 = vmatpush1.msra.mxu0 0.0
      %893 = vmatprep.subr.mxu0 0.0
      %894 = vmatpush1.msra.mxu0 0.0
      %895 = vmatprep.subr.mxu0 0.0
      %896 = vmatpush1.msra.mxu0 0.0
      %897 = vmatprep.subr.mxu0 0.0
      %898 = vmatpush1.msra.mxu0 0.0
      %899 = vmatprep.subr.mxu0 0.0
      %900 = vmatpush1.msra.mxu0 0.0
      %901 = vmatprep.subr.mxu0 0.0
      %902 = vmatpush1.msra.mxu0 0.0
      %903 = vmatprep.subr.mxu0 0.0
      %904 = vmatpush1.msra.mxu0 0.0
      %905 = vmatprep.subr.mxu0 0.0
      %906 = vmatpush1.msra.mxu0 0.0
      %907 = vmatprep.subr.mxu0 0.0
      %908 = vmatpush1.msra.mxu0 0.0
      %909 = vmatprep.subr.mxu0 0.0
      %910 = vmatpush1.msra.mxu0 0.0
      %911 = vmatprep.subr.mxu0 0.0
      %912 = vmatpush1.msra.mxu0 0.0
      %913 = vmatprep.subr.mxu0 0.0
      %914 = vmatpush1.msra.mxu0 0.0
      %915 = vmatprep.subr.mxu0 0.0
      %916 = vmatpush1.msra.mxu0 0.0
      %917 = vmatprep.subr.mxu0 0.0
      %918 = vmatpush1.msra.mxu0 0.0
      %919 = vmatprep.subr.mxu0 0.0
      %920 = vmatpush1.msra.mxu0 0.0
      %921 = vmatprep.subr.mxu0 0.0
      %922 = vmatpush1.msra.mxu0 0.0
      %923 = vmatprep.subr.mxu0 0.0
      %924 = vmatpush1.msra.mxu0 0.0
      %925 = vmatprep.mubr.f32.mxu0 0.0
      %926 = vmatmul.mubr.f32.gmra.mrb[0].mxu0 %v782
      %v927 = vpop.f32.mrb[0].mxu0
      %v928 = vadd.f32 0.0, %v927
      %v929 = vpop.f32.mrb[0].mxu0
      %930 = vdwg.mxu0
      %vm931 = vcmp.lt.s32.totalorder %v773, 15
      %v932 = vsel %vm931, 1, 0
      %vm933 = vcmp.eq.s32.totalorder %v932, 1
      %v934 = vsel %vm933, %v928, -1e+10
      %v935 = vmax.f32 %v855, %v934
      %v936 = vld [vmem:[%s3] sm:$0xff]
      %v937 = vld [vmem:[%s3 + $0x8] sm:$0xff]
      %v938 = vld [vmem:[%s4] sm:$0xff]
      %v939 = vld [vmem:[%s4 + $0x8] sm:$0xff]
      %941 = vrot.lane.b32.xlu0 %v935, 1
      %v942 = vpop.permute.xlu0 %941
      %v944 = vsel %vm661, 0.0, %v942
      %v945 = vsel %vm683, %v944, 0.0
      %947 = vrot.lane.b32.xlu0 %v945, 127
      %v948 = vpop.permute.xlu0 %947
      %950 = vrot.lane.b32.xlu0 %v945, 126
      %v951 = vpop.permute.xlu0 %950
      %954 = vset.pattern.permute.xlu0 0
      %955 = vperm.xlu0 %954, %v938
      %v956 = vpop.permute.xlu0 %955
      %959 = vset.pattern.permute.xlu0 0
      %960 = vperm.xlu0 %959, %v939
      %v961 = vpop.permute.xlu0 %960
      %vm963 = vcmask 195584
      %v965 = vsel %vm963, %v936, 0
      %v968 = vsel %vm963, %v937, 0
      %970 = vmatprep.subr.mxu0 0.0
      %971 = vmatpush1.msra.mxu0 %v945
      %972 = vmatprep.subr.mxu0 0.0
      %973 = vmatpush1.msra.mxu0 %v948
      %974 = vmatprep.subr.mxu0 0.0
      %975 = vmatpush1.msra.mxu0 %v951
      %976 = vmatprep.subr.mxu0 0.0
      %977 = vmatpush1.msra.mxu0 0.0
      %978 = vmatprep.subr.mxu0 0.0
      %979 = vmatpush1.msra.mxu0 0.0
      %980 = vmatprep.subr.mxu0 0.0
      %981 = vmatpush1.msra.mxu0 0.0
      %982 = vmatprep.subr.mxu0 0.0
      %983 = vmatpush1.msra.mxu0 0.0
      %984 = vmatprep.subr.mxu0 0.0
      %985 = vmatpush1.msra.mxu0 0.0
      %986 = vmatprep.subr.mxu0 0.0
      %987 = vmatpush1.msra.mxu0 0.0
      %988 = vmatprep.subr.mxu0 0.0
      %989 = vmatpush1.msra.mxu0 0.0
      %990 = vmatprep.subr.mxu0 0.0
      %991 = vmatpush1.msra.mxu0 0.0
      %992 = vmatprep.subr.mxu0 0.0
      %993 = vmatpush1.msra.mxu0 0.0
      %994 = vmatprep.subr.mxu0 0.0
      %995 = vmatpush1.msra.mxu0 0.0
      %996 = vmatprep.subr.mxu0 0.0
      %997 = vmatpush1.msra.mxu0 0.0
      %998 = vmatprep.subr.mxu0 0.0
      %999 = vmatpush1.msra.mxu0 0.0
      %1000 = vmatprep.subr.mxu0 0.0
      %1001 = vmatpush1.msra.mxu0 0.0
      %1002 = vmatprep.subr.mxu0 0.0
      %1003 = vmatpush1.msra.mxu0 0.0
      %1004 = vmatprep.subr.mxu0 0.0
      %1005 = vmatpush1.msra.mxu0 0.0
      %1006 = vmatprep.subr.mxu0 0.0
      %1007 = vmatpush1.msra.mxu0 0.0
      %1008 = vmatprep.subr.mxu0 0.0
      %1009 = vmatpush1.msra.mxu0 0.0
      %1010 = vmatprep.subr.mxu0 0.0
      %1011 = vmatpush1.msra.mxu0 0.0
      %1012 = vmatprep.subr.mxu0 0.0
      %1013 = vmatpush1.msra.mxu0 0.0
      %1014 = vmatprep.subr.mxu0 0.0
      %1015 = vmatpush1.msra.mxu0 0.0
      %1016 = vmatprep.subr.mxu0 0.0
      %1017 = vmatpush1.msra.mxu0 0.0
      %1018 = vmatprep.subr.mxu0 0.0
      %1019 = vmatpush1.msra.mxu0 0.0
      %1020 = vmatprep.subr.mxu0 0.0
      %1021 = vmatpush1.msra.mxu0 0.0
      %1022 = vmatprep.subr.mxu0 0.0
      %1023 = vmatpush1.msra.mxu0 0.0
      %1024 = vmatprep.subr.mxu0 0.0
      %1025 = vmatpush1.msra.mxu0 0.0
      %1026 = vmatprep.subr.mxu0 0.0
      %1027 = vmatpush1.msra.mxu0 0.0
      %1028 = vmatprep.subr.mxu0 0.0
      %1029 = vmatpush1.msra.mxu0 0.0
      %1030 = vmatprep.subr.mxu0 0.0
      %1031 = vmatpush1.msra.mxu0 0.0
      %1032 = vmatprep.subr.mxu0 0.0
      %1033 = vmatpush1.msra.mxu0 0.0
      %1034 = vmatprep.mubr.f32.mxu0 0.0
      %1035 = vmatmul.mubr.f32.gmra.mrb[0].mxu0 %v965
      %v1036 = vpop.f32.mrb[0].mxu0
      %v1037 = vadd.f32 %v956, %v1036
      %v1038 = vpop.f32.mrb[0].mxu0
      %1039 = vmatprep.mubr.f32.mxu0 0.0
      %1040 = vmatmul.mubr.f32.gmra.mrb[0].mxu0 %v968
      %v1041 = vpop.f32.mrb[0].mxu0
      %v1042 = vadd.f32 %v961, %v1041
      %v1043 = vpop.f32.mrb[0].mxu0
      %1044 = vdwg.mxu0
      %v1045 = vmax.f32 %v1037, 0.0
      %v1046 = vmax.f32 %v1042, 0.0
      %vm1047 = vcmask 64512
      %v1049 = vsel %vm1047, %v1045, 0
      %v1052 = vsel %vm1047, %v1046, 0
      %1054 = vmatprep.subr.mxu0 0.0
      %1055 = vmatpush1.msra.mxu0 %v771
      %1056 = vmatprep.subr.mxu0 0.0
      %1057 = vmatpush1.msra.mxu0 0.0
      %1058 = vmatprep.subr.mxu0 0.0
      %1059 = vmatpush1.msra.mxu0 0.0
      %1060 = vmatprep.subr.mxu0 0.0
      %1061 = vmatpush1.msra.mxu0 0.0
      %1062 = vmatprep.subr.mxu0 0.0
      %1063 = vmatpush1.msra.mxu0 0.0
      %1064 = vmatprep.subr.mxu0 0.0
      %1065 = vmatpush1.msra.mxu0 0.0
      %1066 = vmatprep.subr.mxu0 0.0
      %1067 = vmatpush1.msra.mxu0 0.0
      %1068 = vmatprep.subr.mxu0 0.0
      %1069 = vmatpush1.msra.mxu0 0.0
      %1070 = vmatprep.subr.mxu0 0.0
      %1071 = vmatpush1.msra.mxu0 0.0
      %1072 = vmatprep.subr.mxu0 0.0
      %1073 = vmatpush1.msra.mxu0 0.0
      %1074 = vmatprep.subr.mxu0 0.0
      %1075 = vmatpush1.msra.mxu0 0.0
      %1076 = vmatprep.subr.mxu0 0.0
      %1077 = vmatpush1.msra.mxu0 0.0
      %1078 = vmatprep.subr.mxu0 0.0
      %1079 = vmatpush1.msra.mxu0 0.0
      %1080 = vmatprep.subr.mxu0 0.0
      %1081 = vmatpush1.msra.mxu0 0.0
      %1082 = vmatprep.subr.mxu0 0.0
      %1083 = vmatpush1.msra.mxu0 0.0
      %1084 = vmatprep.subr.mxu0 0.0
      %1085 = vmatpush1.msra.mxu0 0.0
      %1086 = vmatprep.subr.mxu0 0.0
      %1087 = vmatpush1.msra.mxu0 0.0
      %1088 = vmatprep.subr.mxu0 0.0
      %1089 = vmatpush1.msra.mxu0 0.0
      %1090 = vmatprep.subr.mxu0 0.0
      %1091 = vmatpush1.msra.mxu0 0.0
      %1092 = vmatprep.subr.mxu0 0.0
      %1093 = vmatpush1.msra.mxu0 0.0
      %1094 = vmatprep.subr.mxu0 0.0
      %1095 = vmatpush1.msra.mxu0 0.0
      %1096 = vmatprep.subr.mxu0 0.0
      %1097 = vmatpush1.msra.mxu0 0.0
      %1098 = vmatprep.subr.mxu0 0.0
      %1099 = vmatpush1.msra.mxu0 0.0
      %1100 = vmatprep.subr.mxu0 0.0
      %1101 = vmatpush1.msra.mxu0 0.0
      %1102 = vmatprep.subr.mxu0 0.0
      %1103 = vmatpush1.msra.mxu0 0.0
      %1104 = vmatprep.subr.mxu0 0.0
      %1105 = vmatpush1.msra.mxu0 0.0
      %1106 = vmatprep.subr.mxu0 0.0
      %1107 = vmatpush1.msra.mxu0 0.0
      %1108 = vmatprep.subr.mxu0 0.0
      %1109 = vmatpush1.msra.mxu0 0.0
      %1110 = vmatprep.subr.mxu0 0.0
      %1111 = vmatpush1.msra.mxu0 0.0
      %1112 = vmatprep.subr.mxu0 0.0
      %1113 = vmatpush1.msra.mxu0 0.0
      %1114 = vmatprep.subr.mxu0 0.0
      %1115 = vmatpush1.msra.mxu0 0.0
      %1116 = vmatprep.subr.mxu0 0.0
      %1117 = vmatpush1.msra.mxu0 0.0
      %1118 = vmatprep.mubr.f32.mxu0 0.0
      %1119 = vmatmul.mubr.f32.gmra.mrb[0].mxu0 %v1049
      %v1120 = vpop.f32.mrb[0].mxu0
      %v1121 = vadd.f32 0.0, %v1120
      %v1122 = vpop.f32.mrb[0].mxu0
      %1123 = vmatprep.mubr.f32.mxu0 0.0
      %1124 = vmatmul.mubr.f32.gmra.mrb[0].mxu0 %v1052
      %v1125 = vpop.f32.mrb[0].mxu0
      %v1126 = vadd.f32 0.0, %v1125
      %v1127 = vpop.f32.mrb[0].mxu0
      %1128 = vdwg.mxu0
      %1129 = vmatprep.subr.mxu0 0.0
      %1130 = vmatpush1.msra.mxu0 %v778
      %1131 = vmatprep.subr.mxu0 0.0
      %1132 = vmatpush1.msra.mxu0 0.0
      %1133 = vmatprep.subr.mxu0 0.0
      %1134 = vmatpush1.msra.mxu0 0.0
      %1135 = vmatprep.subr.mxu0 0.0
      %1136 = vmatpush1.msra.mxu0 0.0
      %1137 = vmatprep.subr.mxu0 0.0
      %1138 = vmatpush1.msra.mxu0 0.0
      %1139 = vmatprep.subr.mxu0 0.0
      %1140 = vmatpush1.msra.mxu0 0.0
      %1141 = vmatprep.subr.mxu0 0.0
      %1142 = vmatpush1.msra.mxu0 0.0
      %1143 = vmatprep.subr.mxu0 0.0
      %1144 = vmatpush1.msra.mxu0 0.0
      %1145 = vmatprep.subr.mxu0 0.0
      %1146 = vmatpush1.msra.mxu0 0.0
      %1147 = vmatprep.subr.mxu0 0.0
      %1148 = vmatpush1.msra.mxu0 0.0
      %1149 = vmatprep.subr.mxu0 0.0
      %1150 = vmatpush1.msra.mxu0 0.0
      %1151 = vmatprep.subr.mxu0 0.0
      %1152 = vmatpush1.msra.mxu0 0.0
      %1153 = vmatprep.subr.mxu0 0.0
      %1154 = vmatpush1.msra.mxu0 0.0
      %1155 = vmatprep.subr.mxu0 0.0
      %1156 = vmatpush1.msra.mxu0 0.0
      %1157 = vmatprep.subr.mxu0 0.0
      %1158 = vmatpush1.msra.mxu0 0.0
      %1159 = vmatprep.subr.mxu0 0.0
      %1160 = vmatpush1.msra.mxu0 0.0
      %1161 = vmatprep.subr.mxu0 0.0
      %1162 = vmatpush1.msra.mxu0 0.0
      %1163 = vmatprep.subr.mxu0 0.0
      %1164 = vmatpush1.msra.mxu0 0.0
      %1165 = vmatprep.subr.mxu0 0.0
      %1166 = vmatpush1.msra.mxu0 0.0
      %1167 = vmatprep.subr.mxu0 0.0
      %1168 = vmatpush1.msra.mxu0 0.0
      %1169 = vmatprep.subr.mxu0 0.0
      %1170 = vmatpush1.msra.mxu0 0.0
      %1171 = vmatprep.subr.mxu0 0.0
      %1172 = vmatpush1.msra.mxu0 0.0
      %1173 = vmatprep.subr.mxu0 0.0
      %1174 = vmatpush1.msra.mxu0 0.0
      %1175 = vmatprep.subr.mxu0 0.0
      %1176 = vmatpush1.msra.mxu0 0.0
      %1177 = vmatprep.subr.mxu0 0.0
      %1178 = vmatpush1.msra.mxu0 0.0
      %1179 = vmatprep.subr.mxu0 0.0
      %1180 = vmatpush1.msra.mxu0 0.0
      %1181 = vmatprep.subr.mxu0 0.0
      %1182 = vmatpush1.msra.mxu0 0.0
      %1183 = vmatprep.subr.mxu0 0.0
      %1184 = vmatpush1.msra.mxu0 0.0
      %1185 = vmatprep.subr.mxu0 0.0
      %1186 = vmatpush1.msra.mxu0 0.0
      %1187 = vmatprep.subr.mxu0 0.0
      %1188 = vmatpush1.msra.mxu0 0.0
      %1189 = vmatprep.subr.mxu0 0.0
      %1190 = vmatpush1.msra.mxu0 0.0
      %1191 = vmatprep.subr.mxu0 0.0
      %1192 = vmatpush1.msra.mxu0 0.0
      %1193 = vmatprep.mubr.f32.mxu0 0.0
      %1194 = vmatmul.mubr.f32.gmra.mrb[0].mxu0 %v1049
      %v1195 = vpop.f32.mrb[0].mxu0
      %v1196 = vadd.f32 0.0, %v1195
      %v1197 = vpop.f32.mrb[0].mxu0
      %1198 = vmatprep.mubr.f32.mxu0 0.0
      %1199 = vmatmul.mubr.f32.gmra.mrb[0].mxu0 %v1052
      %v1200 = vpop.f32.mrb[0].mxu0
      %v1201 = vadd.f32 0.0, %v1200
      %v1202 = vpop.f32.mrb[0].mxu0
      %1203 = vdwg.mxu0
      %vm1204 = vcmp.lt.s32.totalorder %v773, 8
      %v1205 = vsel %vm1204, 1, 0
      %vm1206 = vcmp.eq.s32.totalorder %v1205, 1
      %v1207 = vsel %vm1206, %v1196, -1e+10
      %v1208 = vsel %vm1206, %v1201, -1e+10
      %v1209 = vmax.f32 %v1121, %v1207
      %v1210 = vmax.f32 %v1126, %v1208
      %v1211 = vld [vmem:[%s5] sm:$0xff]
      %v1212 = vld [vmem:[%s5 + $0x8] sm:$0xff]
      %1214 = vset.pattern.permute.xlu0 0
      %1215 = vperm.xlu0 %1214, %v1211
      %v1216 = vpop.permute.xlu0 %1215
      %1219 = vset.pattern.permute.xlu0 0
      %1220 = vperm.xlu0 %1219, %v1212
      %v1221 = vpop.permute.xlu0 %1220
      %v1223 = vmul.f32 %v1209, %v1216
      %v1224 = vmul.f32 %v1210, %v1221
      %v1225 = vld [vmem:[%s6] sm:$0xff]
      %v1226 = vld [vmem:[%s6 + $0x8] sm:$0xff]
      %1228 = vset.pattern.permute.xlu0 0
      %1229 = vperm.xlu0 %1228, %v1225
      %v1230 = vpop.permute.xlu0 %1229
      %1233 = vset.pattern.permute.xlu0 0
      %1234 = vperm.xlu0 %1233, %v1226
      %v1235 = vpop.permute.xlu0 %1234
      %v1237 = vadd.f32 %v1223, %v1230
      %v1238 = vadd.f32 %v1224, %v1235
      %v1239 = vmax.f32 %v1237, 0.0
      %v1240 = vmax.f32 %v1238, 0.0
      %v1241 = vld [vmem:[%s7] sm:$0xff]
      %v1242 = vld [vmem:[%s7 + $0x8] sm:$0xff]
      %v1243 = vld [vmem:[%s8] sm:$0xff]
      %v1244 = vld [vmem:[%s8 + $0x8] sm:$0xff]
      %1247 = vrot.lane.b32.xlu0 %v1239, 1
      %v1248 = vpop.permute.xlu0 %1247
      %1249 = vrot.lane.b32.xlu0 %v1240, 1
      %v1250 = vpop.permute.xlu0 %1249
      %v1253 = vsel %vm661, 0.0, %v1248
      %v1254 = vsel %vm661, 0.0, %v1250
      %vm1255 = vcmask 39936
      %v1256 = vsel %vm1255, %v1253, 0.0
      %v1257 = vsel %vm1255, %v1254, 0.0
      %1260 = vrot.lane.b32.xlu0 %v1256, 127
      %v1261 = vpop.permute.xlu0 %1260
      %1262 = vrot.lane.b32.xlu0 %v1257, 127
      %v1263 = vpop.permute.xlu0 %1262
      %1266 = vrot.lane.b32.xlu0 %v1256, 126
      %v1267 = vpop.permute.xlu0 %1266
      %1268 = vrot.lane.b32.xlu0 %v1257, 126
      %v1269 = vpop.permute.xlu0 %1268
      %1273 = vset.pattern.permute.xlu0 0
      %1274 = vperm.xlu0 %1273, %v1243
      %v1275 = vpop.permute.xlu0 %1274
      %1278 = vset.pattern.permute.xlu0 0
      %1279 = vperm.xlu0 %1278, %v1244
      %v1280 = vpop.permute.xlu0 %1279
      %vm1282 = vcmask 392192
      %v1284 = vsel %vm1282, %v1241, 0
      %v1287 = vsel %vm1282, %v1242, 0
      %1289 = vmatprep.subr.mxu0 0.0
      %1290 = vmatpush1.msra.mxu0 %v1256
      %1291 = vmatprep.subr.mxu0 0.0
      %1292 = vmatpush1.msra.mxu0 %v1257
      %1293 = vmatprep.subr.mxu0 0.0
      %1294 = vmatpush1.msra.mxu0 %v1261
      %1295 = vmatprep.subr.mxu0 0.0
      %1296 = vmatpush1.msra.mxu0 %v1263
      %1297 = vmatprep.subr.mxu0 0.0
      %1298 = vmatpush1.msra.mxu0 %v1267
      %1299 = vmatprep.subr.mxu0 0.0
      %1300 = vmatpush1.msra.mxu0 %v1269
      %1301 = vmatprep.subr.mxu0 0.0
      %1302 = vmatpush1.msra.mxu0 0.0
      %1303 = vmatprep.subr.mxu0 0.0
      %1304 = vmatpush1.msra.mxu0 0.0
      %1305 = vmatprep.subr.mxu0 0.0
      %1306 = vmatpush1.msra.mxu0 0.0
      %1307 = vmatprep.subr.mxu0 0.0
      %1308 = vmatpush1.msra.mxu0 0.0
      %1309 = vmatprep.subr.mxu0 0.0
      %1310 = vmatpush1.msra.mxu0 0.0
      %1311 = vmatprep.subr.mxu0 0.0
      %1312 = vmatpush1.msra.mxu0 0.0
      %1313 = vmatprep.subr.mxu0 0.0
      %1314 = vmatpush1.msra.mxu0 0.0
      %1315 = vmatprep.subr.mxu0 0.0
      %1316 = vmatpush1.msra.mxu0 0.0
      %1317 = vmatprep.subr.mxu0 0.0
      %1318 = vmatpush1.msra.mxu0 0.0
      %1319 = vmatprep.subr.mxu0 0.0
      %1320 = vmatpush1.msra.mxu0 0.0
      %1321 = vmatprep.subr.mxu0 0.0
      %1322 = vmatpush1.msra.mxu0 0.0
      %1323 = vmatprep.subr.mxu0 0.0
      %1324 = vmatpush1.msra.mxu0 0.0
      %1325 = vmatprep.subr.mxu0 0.0
      %1326 = vmatpush1.msra.mxu0 0.0
      %1327 = vmatprep.subr.mxu0 0.0
      %1328 = vmatpush1.msra.mxu0 0.0
      %1329 = vmatprep.subr.mxu0 0.0
      %1330 = vmatpush1.msra.mxu0 0.0
      %1331 = vmatprep.subr.mxu0 0.0
      %1332 = vmatpush1.msra.mxu0 0.0
      %1333 = vmatprep.subr.mxu0 0.0
      %1334 = vmatpush1.msra.mxu0 0.0
      %1335 = vmatprep.subr.mxu0 0.0
      %1336 = vmatpush1.msra.mxu0 0.0
      %1337 = vmatprep.subr.mxu0 0.0
      %1338 = vmatpush1.msra.mxu0 0.0
      %1339 = vmatprep.subr.mxu0 0.0
      %1340 = vmatpush1.msra.mxu0 0.0
      %1341 = vmatprep.subr.mxu0 0.0
      %1342 = vmatpush1.msra.mxu0 0.0
      %1343 = vmatprep.subr.mxu0 0.0
      %1344 = vmatpush1.msra.mxu0 0.0
      %1345 = vmatprep.subr.mxu0 0.0
      %1346 = vmatpush1.msra.mxu0 0.0
      %1347 = vmatprep.subr.mxu0 0.0
      %1348 = vmatpush1.msra.mxu0 0.0
      %1349 = vmatprep.subr.mxu0 0.0
      %1350 = vmatpush1.msra.mxu0 0.0
      %1351 = vmatprep.subr.mxu0 0.0
      %1352 = vmatpush1.msra.mxu0 0.0
      %1353 = vmatprep.mubr.f32.mxu0 0.0
      %1354 = vmatmul.mubr.f32.gmra.mrb[0].mxu0 %v1284
      %v1355 = vpop.f32.mrb[0].mxu0
      %v1356 = vadd.f32 %v1275, %v1355
      %v1357 = vpop.f32.mrb[0].mxu0
      %1358 = vmatprep.mubr.f32.mxu0 0.0
      %1359 = vmatmul.mubr.f32.gmra.mrb[0].mxu0 %v1287
      %v1360 = vpop.f32.mrb[0].mxu0
      %v1361 = vadd.f32 %v1280, %v1360
      %v1362 = vpop.f32.mrb[0].mxu0
      %1363 = vdwg.mxu0
      %v1364 = vld [vmem:[%s9] sm:$0xff]
      %v1365 = vld [vmem:[%s9 + $0x8] sm:$0xff]
      %1367 = vset.pattern.permute.xlu0 0
      %1368 = vperm.xlu0 %1367, %v1364
      %v1369 = vpop.permute.xlu0 %1368
      %1372 = vset.pattern.permute.xlu0 0
      %1373 = vperm.xlu0 %1372, %v1365
      %v1374 = vpop.permute.xlu0 %1373
      %v1376 = vmul.f32 %v1356, %v1369
      %v1377 = vmul.f32 %v1361, %v1374
      %v1378 = vld [vmem:[%s10] sm:$0xff]
      %v1379 = vld [vmem:[%s10 + $0x8] sm:$0xff]
      %1381 = vset.pattern.permute.xlu0 0
      %1382 = vperm.xlu0 %1381, %v1378
      %v1383 = vpop.permute.xlu0 %1382
      %1386 = vset.pattern.permute.xlu0 0
      %1387 = vperm.xlu0 %1386, %v1379
      %v1388 = vpop.permute.xlu0 %1387
      %v1390 = vadd.f32 %v1376, %v1383
      %v1391 = vadd.f32 %v1377, %v1388
      %v1392 = vmax.f32 %v1390, 0.0
      %v1393 = vmax.f32 %v1391, 0.0
      %v1394 = vld [vmem:[%s11] sm:$0xff]
      %v1395 = vld [vmem:[%s11 + $0x8] sm:$0xff]
      %v1396 = vld [vmem:[%s12] sm:$0xff]
      %v1397 = vld [vmem:[%s12 + $0x8] sm:$0xff]
      %1400 = vrot.lane.b32.xlu0 %v1392, 1
      %v1401 = vpop.permute.xlu0 %1400
      %1402 = vrot.lane.b32.xlu0 %v1393, 1
      %v1403 = vpop.permute.xlu0 %1402
      %v1406 = vsel %vm661, 0.0, %v1401
      %v1407 = vsel %vm661, 0.0, %v1403
      %v1408 = vsel %vm1255, %v1406, 0.0
      %v1409 = vsel %vm1255, %v1407, 0.0
      %1412 = vrot.lane.b32.xlu0 %v1408, 127
      %v1413 = vpop.permute.xlu0 %1412
      %1414 = vrot.lane.b32.xlu0 %v1409, 127
      %v1415 = vpop.permute.xlu0 %1414
      %1418 = vrot.lane.b32.xlu0 %v1408, 126
      %v1419 = vpop.permute.xlu0 %1418
      %1420 = vrot.lane.b32.xlu0 %v1409, 126
      %v1421 = vpop.permute.xlu0 %1420
      %1425 = vset.pattern.permute.xlu0 0
      %1426 = vperm.xlu0 %1425, %v1396
      %v1427 = vpop.permute.xlu0 %1426
      %1430 = vset.pattern.permute.xlu0 0
      %1431 = vperm.xlu0 %1430, %v1397
      %v1432 = vpop.permute.xlu0 %1431
      %v1435 = vsel %vm1282, %v1394, 0
      %v1438 = vsel %vm1282, %v1395, 0
      %1440 = vmatprep.subr.mxu0 0.0
      %1441 = vmatpush1.msra.mxu0 %v1408
      %1442 = vmatprep.subr.mxu0 0.0
      %1443 = vmatpush1.msra.mxu0 %v1409
      %1444 = vmatprep.subr.mxu0 0.0
      %1445 = vmatpush1.msra.mxu0 %v1413
      %1446 = vmatprep.subr.mxu0 0.0
      %1447 = vmatpush1.msra.mxu0 %v1415
      %1448 = vmatprep.subr.mxu0 0.0
      %1449 = vmatpush1.msra.mxu0 %v1419
      %1450 = vmatprep.subr.mxu0 0.0
      %1451 = vmatpush1.msra.mxu0 %v1421
      %1452 = vmatprep.subr.mxu0 0.0
      %1453 = vmatpush1.msra.mxu0 0.0
      %1454 = vmatprep.subr.mxu0 0.0
      %1455 = vmatpush1.msra.mxu0 0.0
      %1456 = vmatprep.subr.mxu0 0.0
      %1457 = vmatpush1.msra.mxu0 0.0
      %1458 = vmatprep.subr.mxu0 0.0
      %1459 = vmatpush1.msra.mxu0 0.0
      %1460 = vmatprep.subr.mxu0 0.0
      %1461 = vmatpush1.msra.mxu0 0.0
      %1462 = vmatprep.subr.mxu0 0.0
      %1463 = vmatpush1.msra.mxu0 0.0
      %1464 = vmatprep.subr.mxu0 0.0
      %1465 = vmatpush1.msra.mxu0 0.0
      %1466 = vmatprep.subr.mxu0 0.0
      %1467 = vmatpush1.msra.mxu0 0.0
      %1468 = vmatprep.subr.mxu0 0.0
      %1469 = vmatpush1.msra.mxu0 0.0
      %1470 = vmatprep.subr.mxu0 0.0
      %1471 = vmatpush1.msra.mxu0 0.0
      %1472 = vmatprep.subr.mxu0 0.0
      %1473 = vmatpush1.msra.mxu0 0.0
      %1474 = vmatprep.subr.mxu0 0.0
      %1475 = vmatpush1.msra.mxu0 0.0
      %1476 = vmatprep.subr.mxu0 0.0
      %1477 = vmatpush1.msra.mxu0 0.0
      %1478 = vmatprep.subr.mxu0 0.0
      %1479 = vmatpush1.msra.mxu0 0.0
      %1480 = vmatprep.subr.mxu0 0.0
      %1481 = vmatpush1.msra.mxu0 0.0
      %1482 = vmatprep.subr.mxu0 0.0
      %1483 = vmatpush1.msra.mxu0 0.0
      %1484 = vmatprep.subr.mxu0 0.0
      %1485 = vmatpush1.msra.mxu0 0.0
      %1486 = vmatprep.subr.mxu0 0.0
      %1487 = vmatpush1.msra.mxu0 0.0
      %1488 = vmatprep.subr.mxu0 0.0
      %1489 = vmatpush1.msra.mxu0 0.0
      %1490 = vmatprep.subr.mxu0 0.0
      %1491 = vmatpush1.msra.mxu0 0.0
      %1492 = vmatprep.subr.mxu0 0.0
      %1493 = vmatpush1.msra.mxu0 0.0
      %1494 = vmatprep.subr.mxu0 0.0
      %1495 = vmatpush1.msra.mxu0 0.0
      %1496 = vmatprep.subr.mxu0 0.0
      %1497 = vmatpush1.msra.mxu0 0.0
      %1498 = vmatprep.subr.mxu0 0.0
      %1499 = vmatpush1.msra.mxu0 0.0
      %1500 = vmatprep.subr.mxu0 0.0
      %1501 = vmatpush1.msra.mxu0 0.0
      %1502 = vmatprep.subr.mxu0 0.0
      %1503 = vmatpush1.msra.mxu0 0.0
      %1504 = vmatprep.mubr.f32.mxu0 0.0
      %1505 = vmatmul.mubr.f32.gmra.mrb[0].mxu0 %v1435
      %v1506 = vpop.f32.mrb[0].mxu0
      %v1507 = vadd.f32 %v1427, %v1506
      %v1508 = vpop.f32.mrb[0].mxu0
      %1509 = vmatprep.mubr.f32.mxu0 0.0
      %1510 = vmatmul.mubr.f32.gmra.mrb[0].mxu0 %v1438
      %v1511 = vpop.f32.mrb[0].mxu0
      %v1512 = vadd.f32 %v1432, %v1511
      %v1513 = vpop.f32.mrb[0].mxu0
      %1514 = vdwg.mxu0
      %v1515 = vadd.f32 %v1209, %v1507
      %v1516 = vadd.f32 %v1210, %v1512
      %v1517 = vld [vmem:[%s13] sm:$0xff]
      %v1518 = vld [vmem:[%s13 + $0x8] sm:$0xff]
      %1520 = vset.pattern.permute.xlu0 0
      %1521 = vperm.xlu0 %1520, %v1517
      %v1522 = vpop.permute.xlu0 %1521
      %1525 = vset.pattern.permute.xlu0 0
      %1526 = vperm.xlu0 %1525, %v1518
      %v1527 = vpop.permute.xlu0 %1526
      %v1529 = vmul.f32 %v1515, %v1522
      %v1530 = vmul.f32 %v1516, %v1527
      %v1531 = vld [vmem:[%s14] sm:$0xff]
      %v1532 = vld [vmem:[%s14 + $0x8] sm:$0xff]
      %1534 = vset.pattern.permute.xlu0 0
      %1535 = vperm.xlu0 %1534, %v1531
      %v1536 = vpop.permute.xlu0 %1535
      %1539 = vset.pattern.permute.xlu0 0
      %1540 = vperm.xlu0 %1539, %v1532
      %v1541 = vpop.permute.xlu0 %1540
      %v1543 = vadd.f32 %v1529, %v1536
      %v1544 = vadd.f32 %v1530, %v1541
      %v1545 = vmax.f32 %v1543, 0.0
      %v1546 = vmax.f32 %v1544, 0.0
      %v1547 = vld [vmem:[%s15] sm:$0xff]
      %v1548 = vld [vmem:[%s15 + $0x8] sm:$0xff]
      %v1549 = vld [vmem:[%s16] sm:$0xff]
      %v1550 = vld [vmem:[%s16 + $0x8] sm:$0xff]
      %1553 = vrot.lane.b32.xlu0 %v1545, 1
      %v1554 = vpop.permute.xlu0 %1553
      %1555 = vrot.lane.b32.xlu0 %v1546, 1
      %v1556 = vpop.permute.xlu0 %1555
      %v1559 = vsel %vm661, 0.0, %v1554
      %v1560 = vsel %vm661, 0.0, %v1556
      %v1561 = vsel %vm1255, %v1559, 0.0
      %v1562 = vsel %vm1255, %v1560, 0.0
      %1565 = vrot.lane.b32.xlu0 %v1561, 127
      %v1566 = vpop.permute.xlu0 %1565
      %1567 = vrot.lane.b32.xlu0 %v1562, 127
      %v1568 = vpop.permute.xlu0 %1567
      %1571 = vrot.lane.b32.xlu0 %v1561, 126
      %v1572 = vpop.permute.xlu0 %1571
      %1573 = vrot.lane.b32.xlu0 %v1562, 126
      %v1574 = vpop.permute.xlu0 %1573
      %1578 = vset.pattern.permute.xlu0 0
      %1579 = vperm.xlu0 %1578, %v1549
      %v1580 = vpop.permute.xlu0 %1579
      %1583 = vset.pattern.permute.xlu0 0
      %1584 = vperm.xlu0 %1583, %v1550
      %v1585 = vpop.permute.xlu0 %1584
      %v1588 = vsel %vm1282, %v1547, 0
      %v1591 = vsel %vm1282, %v1548, 0
      %1593 = vmatprep.subr.mxu0 0.0
      %1594 = vmatpush1.msra.mxu0 %v1561
      %1595 = vmatprep.subr.mxu0 0.0
      %1596 = vmatpush1.msra.mxu0 %v1562
      %1597 = vmatprep.subr.mxu0 0.0
      %1598 = vmatpush1.msra.mxu0 %v1566
      %1599 = vmatprep.subr.mxu0 0.0
      %1600 = vmatpush1.msra.mxu0 %v1568
      %1601 = vmatprep.subr.mxu0 0.0
      %1602 = vmatpush1.msra.mxu0 %v1572
      %1603 = vmatprep.subr.mxu0 0.0
      %1604 = vmatpush1.msra.mxu0 %v1574
      %1605 = vmatprep.subr.mxu0 0.0
      %1606 = vmatpush1.msra.mxu0 0.0
      %1607 = vmatprep.subr.mxu0 0.0
      %1608 = vmatpush1.msra.mxu0 0.0
      %1609 = vmatprep.subr.mxu0 0.0
      %1610 = vmatpush1.msra.mxu0 0.0
      %1611 = vmatprep.subr.mxu0 0.0
      %1612 = vmatpush1.msra.mxu0 0.0
      %1613 = vmatprep.subr.mxu0 0.0
      %1614 = vmatpush1.msra.mxu0 0.0
      %1615 = vmatprep.subr.mxu0 0.0
      %1616 = vmatpush1.msra.mxu0 0.0
      %1617 = vmatprep.subr.mxu0 0.0
      %1618 = vmatpush1.msra.mxu0 0.0
      %1619 = vmatprep.subr.mxu0 0.0
      %1620 = vmatpush1.msra.mxu0 0.0
      %1621 = vmatprep.subr.mxu0 0.0
      %1622 = vmatpush1.msra.mxu0 0.0
      %1623 = vmatprep.subr.mxu0 0.0
      %1624 = vmatpush1.msra.mxu0 0.0
      %1625 = vmatprep.subr.mxu0 0.0
      %1626 = vmatpush1.msra.mxu0 0.0
      %1627 = vmatprep.subr.mxu0 0.0
      %1628 = vmatpush1.msra.mxu0 0.0
      %1629 = vmatprep.subr.mxu0 0.0
      %1630 = vmatpush1.msra.mxu0 0.0
      %1631 = vmatprep.subr.mxu0 0.0
      %1632 = vmatpush1.msra.mxu0 0.0
      %1633 = vmatprep.subr.mxu0 0.0
      %1634 = vmatpush1.msra.mxu0 0.0
      %1635 = vmatprep.subr.mxu0 0.0
      %1636 = vmatpush1.msra.mxu0 0.0
      %1637 = vmatprep.subr.mxu0 0.0
      %1638 = vmatpush1.msra.mxu0 0.0
      %1639 = vmatprep.subr.mxu0 0.0
      %1640 = vmatpush1.msra.mxu0 0.0
      %1641 = vmatprep.subr.mxu0 0.0
      %1642 = vmatpush1.msra.mxu0 0.0
      %1643 = vmatprep.subr.mxu0 0.0
      %1644 = vmatpush1.msra.mxu0 0.0
      %1645 = vmatprep.subr.mxu0 0.0
      %1646 = vmatpush1.msra.mxu0 0.0
      %1647 = vmatprep.subr.mxu0 0.0
      %1648 = vmatpush1.msra.mxu0 0.0
      %1649 = vmatprep.subr.mxu0 0.0
      %1650 = vmatpush1.msra.mxu0 0.0
      %1651 = vmatprep.subr.mxu0 0.0
      %1652 = vmatpush1.msra.mxu0 0.0
      %1653 = vmatprep.subr.mxu0 0.0
      %1654 = vmatpush1.msra.mxu0 0.0
      %1655 = vmatprep.subr.mxu0 0.0
      %1656 = vmatpush1.msra.mxu0 0.0
      %1657 = vmatprep.mubr.f32.mxu0 0.0
      %1658 = vmatmul.mubr.f32.gmra.mrb[0].mxu0 %v1588
      %v1659 = vpop.f32.mrb[0].mxu0
      %v1660 = vadd.f32 %v1580, %v1659
      %v1661 = vpop.f32.mrb[0].mxu0
      %1662 = vmatprep.mubr.f32.mxu0 0.0
      %1663 = vmatmul.mubr.f32.gmra.mrb[0].mxu0 %v1591
      %v1664 = vpop.f32.mrb[0].mxu0
      %v1665 = vadd.f32 %v1585, %v1664
      %v1666 = vpop.f32.mrb[0].mxu0
      %1667 = vdwg.mxu0
      %v1668 = vld [vmem:[%s17] sm:$0xff]
      %v1669 = vld [vmem:[%s17 + $0x8] sm:$0xff]
      %1671 = vset.pattern.permute.xlu0 0
      %1672 = vperm.xlu0 %1671, %v1668
      %v1673 = vpop.permute.xlu0 %1672
      %1676 = vset.pattern.permute.xlu0 0
      %1677 = vperm.xlu0 %1676, %v1669
      %v1678 = vpop.permute.xlu0 %1677
      %v1680 = vmul.f32 %v1660, %v1673
      %v1681 = vmul.f32 %v1665, %v1678
      %v1682 = vld [vmem:[%s18] sm:$0xff]
      %v1683 = vld [vmem:[%s18 + $0x8] sm:$0xff]
      %1685 = vset.pattern.permute.xlu0 0
      %1686 = vperm.xlu0 %1685, %v1682
      %v1687 = vpop.permute.xlu0 %1686
      %1690 = vset.pattern.permute.xlu0 0
      %1691 = vperm.xlu0 %1690, %v1683
      %v1692 = vpop.permute.xlu0 %1691
      %v1694 = vadd.f32 %v1680, %v1687
      %v1695 = vadd.f32 %v1681, %v1692
      %v1696 = vmax.f32 %v1694, 0.0
      %v1697 = vmax.f32 %v1695, 0.0
      %v1698 = vld [vmem:[%s19] sm:$0xff]
      %v1699 = vld [vmem:[%s19 + $0x8] sm:$0xff]
      %v1700 = vld [vmem:[%s20] sm:$0xff]
      %v1701 = vld [vmem:[%s20 + $0x8] sm:$0xff]
      %1704 = vrot.lane.b32.xlu0 %v1696, 1
      %v1705 = vpop.permute.xlu0 %1704
      %1706 = vrot.lane.b32.xlu0 %v1697, 1
      %v1707 = vpop.permute.xlu0 %1706
      %v1710 = vsel %vm661, 0.0, %v1705
      %v1711 = vsel %vm661, 0.0, %v1707
      %v1712 = vsel %vm1255, %v1710, 0.0
      %v1713 = vsel %vm1255, %v1711, 0.0
      %1716 = vrot.lane.b32.xlu0 %v1712, 127
      %v1717 = vpop.permute.xlu0 %1716
      %1718 = vrot.lane.b32.xlu0 %v1713, 127
      %v1719 = vpop.permute.xlu0 %1718
      %1722 = vrot.lane.b32.xlu0 %v1712, 126
      %v1723 = vpop.permute.xlu0 %1722
      %1724 = vrot.lane.b32.xlu0 %v1713, 126
      %v1725 = vpop.permute.xlu0 %1724
      %1729 = vset.pattern.permute.xlu0 0
      %1730 = vperm.xlu0 %1729, %v1700
      %v1731 = vpop.permute.xlu0 %1730
      %1734 = vset.pattern.permute.xlu0 0
      %1735 = vperm.xlu0 %1734, %v1701
      %v1736 = vpop.permute.xlu0 %1735
      %v1739 = vsel %vm1282, %v1698, 0
      %v1742 = vsel %vm1282, %v1699, 0
      %1744 = vmatprep.subr.mxu0 0.0
      %1745 = vmatpush1.msra.mxu0 %v1712
      %1746 = vmatprep.subr.mxu0 0.0
      %1747 = vmatpush1.msra.mxu0 %v1713
      %1748 = vmatprep.subr.mxu0 0.0
      %1749 = vmatpush1.msra.mxu0 %v1717
      %1750 = vmatprep.subr.mxu0 0.0
      %1751 = vmatpush1.msra.mxu0 %v1719
      %1752 = vmatprep.subr.mxu0 0.0
      %1753 = vmatpush1.msra.mxu0 %v1723
      %1754 = vmatprep.subr.mxu0 0.0
      %1755 = vmatpush1.msra.mxu0 %v1725
      %1756 = vmatprep.subr.mxu0 0.0
      %1757 = vmatpush1.msra.mxu0 0.0
      %1758 = vmatprep.subr.mxu0 0.0
      %1759 = vmatpush1.msra.mxu0 0.0
      %1760 = vmatprep.subr.mxu0 0.0
      %1761 = vmatpush1.msra.mxu0 0.0
      %1762 = vmatprep.subr.mxu0 0.0
      %1763 = vmatpush1.msra.mxu0 0.0
      %1764 = vmatprep.subr.mxu0 0.0
      %1765 = vmatpush1.msra.mxu0 0.0
      %1766 = vmatprep.subr.mxu0 0.0
      %1767 = vmatpush1.msra.mxu0 0.0
      %1768 = vmatprep.subr.mxu0 0.0
      %1769 = vmatpush1.msra.mxu0 0.0
      %1770 = vmatprep.subr.mxu0 0.0
      %1771 = vmatpush1.msra.mxu0 0.0
      %1772 = vmatprep.subr.mxu0 0.0
      %1773 = vmatpush1.msra.mxu0 0.0
      %1774 = vmatprep.subr.mxu0 0.0
      %1775 = vmatpush1.msra.mxu0 0.0
      %1776 = vmatprep.subr.mxu0 0.0
      %1777 = vmatpush1.msra.mxu0 0.0
      %1778 = vmatprep.subr.mxu0 0.0
      %1779 = vmatpush1.msra.mxu0 0.0
      %1780 = vmatprep.subr.mxu0 0.0
      %1781 = vmatpush1.msra.mxu0 0.0
      %1782 = vmatprep.subr.mxu0 0.0
      %1783 = vmatpush1.msra.mxu0 0.0
      %1784 = vmatprep.subr.mxu0 0.0
      %1785 = vmatpush1.msra.mxu0 0.0
      %1786 = vmatprep.subr.mxu0 0.0
      %1787 = vmatpush1.msra.mxu0 0.0
      %1788 = vmatprep.subr.mxu0 0.0
      %1789 = vmatpush1.msra.mxu0 0.0
      %1790 = vmatprep.subr.mxu0 0.0
      %1791 = vmatpush1.msra.mxu0 0.0
      %1792 = vmatprep.subr.mxu0 0.0
      %1793 = vmatpush1.msra.mxu0 0.0
      %1794 = vmatprep.subr.mxu0 0.0
      %1795 = vmatpush1.msra.mxu0 0.0
      %1796 = vmatprep.subr.mxu0 0.0
      %1797 = vmatpush1.msra.mxu0 0.0
      %1798 = vmatprep.subr.mxu0 0.0
      %1799 = vmatpush1.msra.mxu0 0.0
      %1800 = vmatprep.subr.mxu0 0.0
      %1801 = vmatpush1.msra.mxu0 0.0
      %1802 = vmatprep.subr.mxu0 0.0
      %1803 = vmatpush1.msra.mxu0 0.0
      %1804 = vmatprep.subr.mxu0 0.0
      %1805 = vmatpush1.msra.mxu0 0.0
      %1806 = vmatprep.subr.mxu0 0.0
      %1807 = vmatpush1.msra.mxu0 0.0
      %1808 = vmatprep.mubr.f32.mxu0 0.0
      %1809 = vmatmul.mubr.f32.gmra.mrb[0].mxu0 %v1739
      %v1810 = vpop.f32.mrb[0].mxu0
      %v1811 = vadd.f32 %v1731, %v1810
      %v1812 = vpop.f32.mrb[0].mxu0
      %1813 = vmatprep.mubr.f32.mxu0 0.0
      %1814 = vmatmul.mubr.f32.gmra.mrb[0].mxu0 %v1742
      %v1815 = vpop.f32.mrb[0].mxu0
      %v1816 = vadd.f32 %v1736, %v1815
      %v1817 = vpop.f32.mrb[0].mxu0
      %1818 = vdwg.mxu0
      %v1819 = vadd.f32 %v1515, %v1811
      %v1820 = vadd.f32 %v1516, %v1816
      %vm1821 = vcmask 31744
      %1822 = vst.msk [vmem:[%s653] sm:$0xff] %vm1821, %v1819
      %1823 = vst.msk [vmem:[%s653 + $0x8] sm:$0xff] %vm1821, %v1820
      %p1824 = scmp.lt.s32.totalorder %s32, 1
      %s1825 = scalar_select %p1824, %s32, 1
      %s1826 = smul.addr %s1825, 2
      %s1827 = smul.addr %s1826, 8
      %s1828 = scalar_lea.vmem %s21, %s1827
      // Predicated region
      $region105: #{tpu_custom_call.1} parent=103 // pred_check
        %p1829 = pneg %p496
      $region106: #{tpu_custom_call.1} parent=103 // pred_check_branch
        %1831 = sbr.rel (%p1829) target = $region108
      $region107: #{tpu_custom_call.1} parent=103 // pred_region
        _
      $region108: #{tpu_custom_call.1} parent=103 // pred_fallthru
        _
    $region104: #{tpu_custom_call.1} parent=5 // pred_fallthru
      _
    %p1832 = scmp.le.s32.totalorder 2, %s27
    // Predicated region
    $region109: #{tpu_custom_call.1} parent=5 // pred_check
      %p1833 = pneg %p1832
    $region110: #{tpu_custom_call.1} parent=5 // pred_check_branch
      %1835 = sbr.rel (%p1833) target = $region112
    $region111: #{tpu_custom_call.1} parent=5 // pred_region
      %s1836 = ssub.s32 %s27, 2
      // Predicated region
      $region113: #{tpu_custom_call.1} parent=111 // pred_check
        %p1837 = pneg %p502
      $region114: #{tpu_custom_call.1} parent=111 // pred_check_branch
        %1839 = sbr.rel (%p1837) target = $region116
      $region115: #{tpu_custom_call.1} parent=111 // pred_region
        %p1840 = scmp.lt.s32.totalorder %s33, 1
        %s1841 = scalar_select %p1840, %s33, 1
        %s1842 = smul.addr %s1841, 2
        %s1843 = smul.addr %s1842, 8
        %s1844 = scalar_lea.vmem %s21, %s1843
      $region116: #{tpu_custom_call.1} parent=111 // pred_fallthru
        _
    $region112: #{tpu_custom_call.1} parent=5 // pred_fallthru
      _
  $region6: #{tpu_custom_call.1} parent=0 // loop_footer
    %s31 = sadd.s32 1, %s27
  $region7: #{tpu_custom_call.1} parent=0 // loop_footer_branch
    %26 = sbr.rel target = $region3
  $region8: #{tpu_custom_call.1} parent=0 // loop_exit
    _

</llo_original>
